<compile_context>
chip_gen: v7x
topology: tpu7x:2x2x1
jax: 0.10.0
libtpu: 0.0.40
codegen_flags: <defaults>
</compile_context>

<pallas_src>
import jax
import jax.numpy as jnp
from jax.experimental import pallas as pl
from jax.experimental.pallas import tpu as pltpu

_LANE = 128                 # lane width (last dim)
_SMALL_BATCH_MAX = 512      # no-grid path for B <= this (if it fits VMEM)
_BATCH_TILE = 512           # preferred batch tile for the grid path
_K_TILE_MAX = 2048          # max K (input-feature) tile for the grid path
_MiB = 1024 * 1024


def _round_up(x, m):
    return ((x + m - 1) // m) * m


def _cdiv(a, b):
    return -(-a // b)


# ---------------------------------------------------------------------------
# Kernels
# ---------------------------------------------------------------------------
def _mlp_small_kernel(x_ref, w1_ref, b1_ref, w2_ref, b2_ref, out_ref):
    """Whole (small-batch) problem resident in VMEM -- no grid, no pipeline."""
    x = x_ref[...].astype(jnp.bfloat16)          # cast on VPU; f32 x never duplicated in HBM
    h = jnp.dot(x, w1_ref[...], preferred_element_type=jnp.float32)
    h = jnp.maximum(h + b1_ref[...], 0.0)        # bias + ReLU in f32
    out = jnp.dot(h.astype(jnp.bfloat16), w2_ref[...],
                  preferred_element_type=jnp.float32) + b2_ref[...]
    out_ref[...] = out.astype(out_ref.dtype)


def _mlp_grid_kernel(x_ref, w1_ref, b1_ref, w2_ref, b2_ref, out_ref, h_acc):
    """Batch-tiled / K-tiled path.

    grid = (batch tiles ["parallel"], K tiles ["arbitrary", innermost]).
    h_acc is a (TB, Hp) f32 accumulator that persists across the K axis.
    """
    k = pl.program_id(1)

    @pl.when(k == 0)
    def _():
        h_acc[...] = jnp.zeros_like(h_acc)

    h_acc[...] += jnp.dot(x_ref[...].astype(jnp.bfloat16), w1_ref[...],
                          preferred_element_type=jnp.float32)

    @pl.when(k == pl.num_programs(1) - 1)
    def _():
        h = jnp.maximum(h_acc[...] + b1_ref[...], 0.0)
        out = jnp.dot(h.astype(jnp.bfloat16), w2_ref[...],
                      preferred_element_type=jnp.float32) + b2_ref[...]
        out_ref[...] = out.astype(out_ref.dtype)


# ---------------------------------------------------------------------------
# Tile selection
# ---------------------------------------------------------------------------
def _select_batch_tile(B):
    # Prefer 512 (per-step work >> ~0.35 us fixed pipeline cost).  If that
    # yields an odd step count, fall back to 256 when it makes the count even
    # so the "parallel" batch axis splits evenly across v7x's 2 TensorCores.
    for tb in (_BATCH_TILE, _BATCH_TILE // 2):
        if _cdiv(B, tb) % 2 == 0:
            return tb
    return _BATCH_TILE


def _select_k_tile(Dp):
    # Largest 128-multiple divisor of Dp that is <= _K_TILE_MAX so the K grid
    # tiles Dp exactly (zero-padded weights keep the reduction exact).
    if Dp <= _K_TILE_MAX:
        return Dp
    m = Dp // _LANE
    best = 1
    for d in range(1, m + 1):
        if m % d == 0 and d * _LANE <= _K_TILE_MAX:
            best = d
    return best * _LANE


# ---------------------------------------------------------------------------
# Parameter prep (one-time) and forward pass
# ---------------------------------------------------------------------------
def prepare_params(w1, b1, w2, b2):
    """One-time weight prep: zero-pad to lane-dense (128-multiple) shapes and
    cast matmul operands to bf16 (biases stay f32).  Call once and reuse; this
    removes all per-call weight conversion traffic from the forward path."""
    D, H = w1.shape
    C = w2.shape[1]
    Dp, Hp, Cp = _round_up(D, _LANE), _round_up(H, _LANE), _round_up(C, _LANE)
    w1_p = jnp.zeros((Dp, Hp), jnp.bfloat16).at[:D, :H].set(w1.astype(jnp.bfloat16))
    b1_p = jnp.zeros((1, Hp), jnp.float32).at[:, :H].set(
        b1.reshape(1, H).astype(jnp.float32))
    w2_p = jnp.zeros((Hp, Cp), jnp.bfloat16).at[:H, :C].set(w2.astype(jnp.bfloat16))
    b2_p = jnp.zeros((1, Cp), jnp.float32).at[:, :C].set(
        b2.reshape(1, C).astype(jnp.float32))
    return {"w1": w1_p, "b1": b1_p, "w2": w2_p, "b2": b2_p, "D": D, "C": C}


def neural_net_forward(x_nchw, params):
    """Forward pass of NeuralNet.  x_nchw: (B, C, H, W) float32 (any trailing
    shape is flattened per row, matching torch's x.view(x.size(0), -1))."""
    w1_p, b1_p, w2_p, b2_p = params["w1"], params["b1"], params["w2"], params["b2"]
    D, C = params["D"], params["C"]
    Dp, Hp = w1_p.shape
    Cp = w2_p.shape[1]

    B = x_nchw.shape[0]
    x2d = x_nchw.reshape(B, -1).astype(jnp.float32)
    assert x2d.shape[1] == D, (x2d.shape, D)
    if D != Dp:                                    # ragged K only: pad feature dim
        x2d = jnp.pad(x2d, ((0, 0), (0, Dp - D)))

    # ---- small-batch path: one kernel invocation, everything in VMEM -------
    small_bytes = (B * Dp * 4 + Dp * Hp * 2 + Hp * 4 + Hp * Cp * 2 + Cp * 4
                   + B * Cp * 4)
    if B <= _SMALL_BATCH_MAX and small_bytes <= 24 * _MiB:
        out_p = pl.pallas_call(
            _mlp_small_kernel,
            out_shape=jax.ShapeDtypeStruct((B, Cp), jnp.float32),
            in_specs=[pl.BlockSpec(memory_space=pltpu.MemorySpace.VMEM)] * 5,
            out_specs=pl.BlockSpec(memory_space=pltpu.MemorySpace.VMEM),
        )(x2d, w1_p, b1_p, w2_p, b2_p)
        return out_p[:, :C]

    # ---- grid path: batch tiles ("parallel") x K tiles ("arbitrary") -------
    TB = _select_batch_tile(B)
    TK = _select_k_tile(Dp)
    nb, nk = _cdiv(B, TB), Dp // TK

    # Explicit VMEM budget from the actual buffer sizes (double-buffered
    # pipeline inputs/outputs + accumulator scratch), with 2x headroom, capped
    # at v7x's 64 MiB physical VMEM.
    need = (2 * TB * TK * 4 + 2 * TK * Hp * 2 + 2 * Hp * 4
            + 2 * Hp * Cp * 2 + 2 * Cp * 4 + 2 * TB * Cp * 4 + TB * Hp * 4)
    vmem_bytes = int(min(max(2 * need, 32 * _MiB), 64 * _MiB))

    out_p = pl.pallas_call(
        _mlp_grid_kernel,
        out_shape=jax.ShapeDtypeStruct((B, Cp), jnp.float32),
        grid=(nb, nk),
        in_specs=[
            pl.BlockSpec((TB, TK), lambda i, k: (i, k)),   # x: f32, streamed
            pl.BlockSpec((TK, Hp), lambda i, k: (k, 0)),   # w1: bf16, per-K tile
            pl.BlockSpec((1, Hp), lambda i, k: (0, 0)),    # b1: VMEM-resident
            pl.BlockSpec((Hp, Cp), lambda i, k: (0, 0)),   # w2: VMEM-resident
            pl.BlockSpec((1, Cp), lambda i, k: (0, 0)),    # b2: VMEM-resident
        ],
        out_specs=pl.BlockSpec((TB, Cp), lambda i, k: (i, 0)),
        scratch_shapes=[pltpu.VMEM((TB, Hp), jnp.float32)],
        compiler_params=pltpu.CompilerParams(
            dimension_semantics=("parallel", "arbitrary"),
            vmem_limit_bytes=vmem_bytes,
        ),
    )(x2d, w1_p, b1_p, w2_p, b2_p)
    return out_p[:, :C]


# ---------------------------------------------------------------------------
# Init / reference / demo
# ---------------------------------------------------------------------------
def init_params(key, input_size, num_classes, hidden=500):
    """Deterministic init mimicking torch.nn.Linear (U[-1/sqrt(fan_in), 1/sqrt(fan_in)])."""
    k1, k2, k3, k4 = jax.random.split(key, 4)
    lim1 = 1.0 / jnp.sqrt(jnp.float32(input_size))
    lim2 = 1.0 / jnp.sqrt(jnp.float32(hidden))
    w1 = jax.random.uniform(k1, (input_size, hidden), jnp.float32, -lim1, lim1)
    b1 = jax.random.uniform(k2, (hidden,), jnp.float32, -lim1, lim1)
    w2 = jax.random.uniform(k3, (hidden, num_classes), jnp.float32, -lim2, lim2)
    b2 = jax.random.uniform(k4, (num_classes,), jnp.float32, -lim2, lim2)
    return w1, b1, w2, b2


def _reference(x_nchw, w1, b1, w2, b2):
    """Pure-JAX reference with the same bf16-operand / f32-accumulate recipe.
    (Pure-f32 torch semantics would differ by ~1e-2; documented deviation.)"""
    B = x_nchw.shape[0]
    x2d = x_nchw.reshape(B, -1)
    h = jnp.dot(x2d.astype(jnp.bfloat16), w1.astype(jnp.bfloat16),
                preferred_element_type=jnp.float32) + b1.reshape(1, -1)
    h = jnp.maximum(h, 0.0)
    return jnp.dot(h.astype(jnp.bfloat16), w2.astype(jnp.bfloat16),
                   preferred_element_type=jnp.float32) + b2.reshape(1, -1)


if __name__ == "__main__":
    key = jax.random.PRNGKey(0)
    kx, kp, kx2, kp2, kx3 = jax.random.split(key, 5)

    # Spec-sized demo: B=2, C=4, 16x16 -> input_size = 1024, num_classes = 10.
    B, C_in, Himg, Wimg = 2, 4, 16, 16
    input_size = C_in * Himg * Wimg
    num_classes = 10

    x = jax.random.normal(kx, (B, C_in, Himg, Wimg), jnp.float32)
    w1, b1, w2, b2 = init_params(kp, input_size, num_classes)
    params = prepare_params(w1, b1, w2, b2)          # one-time weight prep

    # 1) small-batch (no-grid) path.
    out = jax.block_until_ready(neural_net_forward(x, params))
    ref = _reference(x, w1, b1, w2, b2)
    assert out.shape == (B, num_classes)
    assert jnp.allclose(out, ref, atol=2e-2, rtol=2e-2), \
        float(jnp.max(jnp.abs(out - ref)))

    # 2) batch-tiled grid path: TB=512, ragged last batch tile, single K tile.
    B_big = 1040
    x_big = jax.random.normal(kx2, (B_big, C_in, Himg, Wimg), jnp.float32)
    out_big = jax.block_until_ready(neural_net_forward(x_big, params))
    ref_big = _reference(x_big, w1, b1, w2, b2)
    assert out_big.shape == (B_big, num_classes)
    assert jnp.allclose(out_big, ref_big, atol=2e-2, rtol=2e-2), \
        float(jnp.max(jnp.abs(out_big - ref_big)))

    # 3) K-tiled path: input_size=4096 -> two K tiles, plus a ragged batch tile.
    input_size2 = 4 * 32 * 32
    w1b, b1b, w2b, b2b = init_params(kp2, input_size2, num_classes)
    params2 = prepare_params(w1b, b1b, w2b, b2b)
    B3 = 516
    x3 = jax.random.normal(kx3, (B3, 4, 32, 32), jnp.float32)
    out3 = jax.block_until_ready(neural_net_forward(x3, params2))
    ref3 = _reference(x3, w1b, b1b, w2b, b2b)
    assert out3.shape == (B3, num_classes)
    assert jnp.allclose(out3, ref3, atol=2e-2, rtol=2e-2), \
        float(jnp.max(jnp.abs(out3 - ref3)))

    print("KERNEL_OK")
</pallas_src>

<mosaic_0001>
module attributes {stable_mosaic.version = 11 : i64} {
  func.func @_mlp_small_kernel(%arg0: memref<2x1024xf32, #tpu.memory_space<vmem>>, %arg1: memref<1024x512xbf16, #tpu.memory_space<vmem>>, %arg2: memref<1x512xf32, #tpu.memory_space<vmem>>, %arg3: memref<512x128xbf16, #tpu.memory_space<vmem>>, %arg4: memref<1x128xf32, #tpu.memory_space<vmem>>, %arg5: memref<2x128xf32, #tpu.memory_space<vmem>>) attributes {dimension_semantics = [], scalar_prefetch = 0 : i64, scratch_operands = 0 : i64, tpu.core_type = #tpu.core_type<tc>} {
    %c0 = arith.constant 0 : index
    %c0_0 = arith.constant 0 : index
    %0 = vector.load %arg0[%c0, %c0_0] : memref<2x1024xf32, #tpu.memory_space<vmem>>, vector<2x1024xf32>
    %1 = arith.truncf %0 : vector<2x1024xf32> to vector<2x1024xbf16>
    %c0_1 = arith.constant 0 : index
    %c0_2 = arith.constant 0 : index
    %2 = vector.load %arg1[%c0_1, %c0_2] : memref<1024x512xbf16, #tpu.memory_space<vmem>>, vector<1024x512xbf16>
    %cst = arith.constant dense<0.000000e+00> : vector<2x512xf32>
    %3 = tpu.matmul %1, %2, %cst {dimension_numbers = #tpu.dot_dimension_numbers<[1], [0], [0], [1], [0, 0, 1, 1], [], []>} : vector<2x1024xbf16>, vector<1024x512xbf16>, vector<2x512xf32> -> vector<2x512xf32>
    %c0_3 = arith.constant 0 : index
    %c0_4 = arith.constant 0 : index
    %4 = vector.load %arg2[%c0_3, %c0_4] : memref<1x512xf32, #tpu.memory_space<vmem>>, vector<1x512xf32>
    %5 = vector.broadcast %4 : vector<1x512xf32> to vector<2x512xf32>
    %6 = arith.addf %3, %5 : vector<2x512xf32>
    %cst_5 = arith.constant 0.000000e+00 : f32
    %7 = vector.broadcast %cst_5 : f32 to vector<2x512xf32>
    %8 = arith.maximumf %6, %7 : vector<2x512xf32>
    %9 = arith.truncf %8 : vector<2x512xf32> to vector<2x512xbf16>
    %c0_6 = arith.constant 0 : index
    %c0_7 = arith.constant 0 : index
    %10 = vector.load %arg3[%c0_6, %c0_7] : memref<512x128xbf16, #tpu.memory_space<vmem>>, vector<512x128xbf16>
    %cst_8 = arith.constant dense<0.000000e+00> : vector<2x128xf32>
    %11 = tpu.matmul %9, %10, %cst_8 {dimension_numbers = #tpu.dot_dimension_numbers<[1], [0], [0], [1], [0, 0, 1, 1], [], []>} : vector<2x512xbf16>, vector<512x128xbf16>, vector<2x128xf32> -> vector<2x128xf32>
    %c0_9 = arith.constant 0 : index
    %c0_10 = arith.constant 0 : index
    %12 = vector.load %arg4[%c0_9, %c0_10] : memref<1x128xf32, #tpu.memory_space<vmem>>, vector<1x128xf32>
    %13 = vector.broadcast %12 : vector<1x128xf32> to vector<2x128xf32>
    %14 = arith.addf %11, %13 : vector<2x128xf32>
    %c0_11 = arith.constant 0 : index
    %c0_12 = arith.constant 0 : index
    %15 = vector.load %arg5[%c0_11, %c0_12] : memref<2x128xf32, #tpu.memory_space<vmem>>, vector<2x128xf32>
    tpu.vector_store %arg5[%c0_11, %c0_12], %14 {strides = array<i32>} : memref<2x128xf32, #tpu.memory_space<vmem>>, vector<2x128xf32>,
    return
  }
}

</mosaic_0001>

<llo_original>
// kernel: tpu_custom_call.1
$region0: #{tpu_custom_call.1}
  #allocation0 [shape = 'u32[]', space=smem, size = 0x4, offset = 0x4, fixed_abs, tag = 'smem constant byte address 0x4 - core index']
  #allocation1 [shape = 'u32[144,128]{1,0:T(1,128)}', space=vmem, size = 0x12000, scoped, tag = 'internal scratch']
  %s0 = inlined_call_operand.hbm [shape: f32[2,1024], index: 0, kind: input, shape index: {}]
  %s1 = inlined_call_operand.hbm [shape: bf16[1024,512], index: 1, kind: input, shape index: {}]
  %s2 = inlined_call_operand.vmem [shape: f32[1,512], index: 2, kind: input, shape index: {}]
  %s3 = inlined_call_operand.hbm [shape: bf16[512,128], index: 3, kind: input, shape index: {}]
  %s4 = inlined_call_operand.vmem [shape: f32[1,128], index: 4, kind: input, shape index: {}]
  %s5 = inlined_call_operand.hbm [shape: f32[2,128], index: 5, kind: output, shape index: {}]
  %s6 = sld [smem:[#allocation0]]
  $region42: #{tpu_custom_call.1} parent=0
    _
  %s8 = ssub.s32 1, %s6
  %s9 = scalar_select 0, %s8, %s6
  $region1: #{tpu_custom_call.1} parent=0
    #allocation2 [shape = 'u8[8192]{0}', space=vmem, size = 0x2000, scoped, tag = 'input window, operand 0, single buffered']
    #allocation3 [shape = 's32[1]{0}', space=sflag, size = 0x4, scoped, tag = 'scoped memory for tpu_custom_call.1']
    #allocation4 [shape = 's32[1]{0}', space=sflag, size = 0x4, scoped, tag = 'scoped memory for tpu_custom_call.1']
    #allocation5 [shape = 'u8[1048576]{0}', space=vmem, size = 0x100000, scoped, tag = 'input window, operand 1, single buffered']
    #allocation6 [shape = 's32[1]{0}', space=sflag, size = 0x4, scoped, tag = 'scoped memory for tpu_custom_call.1']
    #allocation7 [shape = 'u8[131072]{0}', space=vmem, size = 0x20000, scoped, tag = 'input window, operand 3, single buffered']
    #allocation8 [shape = 'u8[1024]{0}', space=vmem, size = 0x400, scoped, tag = 'output window, operand 0, single buffered']
    %10 = vsyncpa [#allocation3], 0
    %11 = vsyncpa [#allocation6], 0
    %12 = vsyncpa [#allocation4], 0
    // Predicated region
    $region2: #{tpu_custom_call.1} parent=1 // pred_check
      _
    $region3: #{tpu_custom_call.1} parent=1 // pred_check_branch
      %14 = sbr.rel (0) target = $region5
    $region4: #{tpu_custom_call.1} parent=1 // pred_region
      %s16 = ssub.s32 256, 256
      %17 = vsyncadd [#allocation3], %s16
      %s19 = sshll.u32 [#allocation2], 4
      %s20 = int_to_ptr.vmem [resolvable:$true] %s19
      %22 = dma.hbm_to_vmem [thread:$0]  %s0, 256, %s20, [#allocation3]
    $region5: #{tpu_custom_call.1} parent=1 // pred_fallthru
      _
    // Predicated region
    $region6: #{tpu_custom_call.1} parent=1 // pred_check
      _
    $region7: #{tpu_custom_call.1} parent=1 // pred_check_branch
      %24 = sbr.rel (0) target = $region9
    $region8: #{tpu_custom_call.1} parent=1 // pred_region
      %s26 = ssub.s32 32768, 32768
      %27 = vsyncadd [#allocation6], %s26
      %s28 = sshll.u32 [#allocation5], 4
      %s29 = int_to_ptr.vmem [resolvable:$true] %s28
      %34 = dma.hbm_to_vmem [thread:$0]  %s1, 32768, %s29, [#allocation6], 256, 256, 16
    $region9: #{tpu_custom_call.1} parent=1 // pred_fallthru
      _
    // Predicated region
    $region10: #{tpu_custom_call.1} parent=1 // pred_check
      _
    $region11: #{tpu_custom_call.1} parent=1 // pred_check_branch
      %36 = sbr.rel (0) target = $region13
    $region12: #{tpu_custom_call.1} parent=1 // pred_region
      _
    $region13: #{tpu_custom_call.1} parent=1 // pred_fallthru
      _
    // Predicated region
    $region14: #{tpu_custom_call.1} parent=1 // pred_check
      _
    $region15: #{tpu_custom_call.1} parent=1 // pred_check_branch
      %38 = sbr.rel (0) target = $region17
    $region16: #{tpu_custom_call.1} parent=1 // pred_region
      %s40 = ssub.s32 4096, 4096
      %41 = vsyncadd [#allocation6], %s40
      %s42 = sshll.u32 [#allocation7], 4
      %s43 = int_to_ptr.vmem [resolvable:$true] %s42
      %48 = dma.hbm_to_vmem [thread:$0]  %s3, 4096, %s43, [#allocation6], 64, 64, 4
    $region17: #{tpu_custom_call.1} parent=1 // pred_fallthru
      _
    // Predicated region
    $region18: #{tpu_custom_call.1} parent=1 // pred_check
      _
    $region19: #{tpu_custom_call.1} parent=1 // pred_check_branch
      %50 = sbr.rel (0) target = $region21
    $region20: #{tpu_custom_call.1} parent=1 // pred_region
      _
    $region21: #{tpu_custom_call.1} parent=1 // pred_fallthru
      _
    // Predicated region
    $region22: #{tpu_custom_call.1} parent=1 // pred_check
      _
    $region23: #{tpu_custom_call.1} parent=1 // pred_check_branch
      %52 = sbr.rel (0) target = $region25
    $region24: #{tpu_custom_call.1} parent=1 // pred_region
      %53 = dma.done [#allocation3], 256
    $region25: #{tpu_custom_call.1} parent=1 // pred_fallthru
      _
    // Predicated region
    $region26: #{tpu_custom_call.1} parent=1 // pred_check
      _
    $region27: #{tpu_custom_call.1} parent=1 // pred_check_branch
      %55 = sbr.rel (0) target = $region29
    $region28: #{tpu_custom_call.1} parent=1 // pred_region
      %56 = dma.done [#allocation6], 32768
    $region29: #{tpu_custom_call.1} parent=1 // pred_fallthru
      _
    // Predicated region
    $region30: #{tpu_custom_call.1} parent=1 // pred_check
      _
    $region31: #{tpu_custom_call.1} parent=1 // pred_check_branch
      %58 = sbr.rel (0) target = $region33
    $region32: #{tpu_custom_call.1} parent=1 // pred_region
      %59 = dma.done [#allocation6], 4096
    $region33: #{tpu_custom_call.1} parent=1 // pred_fallthru
      _
    %v61 = vld [vmem:[#allocation2] sm:$0xff]
    %v62 = vld [vmem:[#allocation2 + $0x8] sm:$0xff]
    %v65 = vcombine.high %v61, %v61
    %v67 = vunpack.c.l.s4 1983009808
    %v68 = vunpack.c.0.s8 %v67
    %v69 = vlaneseq
    %v70 = vshrl.u32 %v69, 7
    %v71 = vsub.s32 %v68, %v70
    %v72 = vrot.slane %v61, %v71
    %v74 = vunpack.c.l.s4 1983009808
    %v75 = vunpack.c.0.s8 %v74
    %v76 = vlaneseq
    %v77 = vshrl.u32 %v76, 7
    %v78 = vsub.s32 %v75, %v77
    %v79 = vrot.slane %v65, %v78
    %v80 = vcombine.high %v72, %v72
    %v81 = vcombine.high %v79, %v79
    %v82 = vcombine.high %v62, %v62
    %v84 = vunpack.c.l.s4 1983009808
    %v85 = vunpack.c.0.s8 %v84
    %v86 = vlaneseq
    %v87 = vshrl.u32 %v86, 7
    %v88 = vsub.s32 %v85, %v87
    %v89 = vrot.slane %v62, %v88
    %v91 = vunpack.c.l.s4 1983009808
    %v92 = vunpack.c.0.s8 %v91
    %v93 = vlaneseq
    %v94 = vshrl.u32 %v93, 7
    %v95 = vsub.s32 %v92, %v94
    %v96 = vrot.slane %v82, %v95
    %v97 = vcombine.high %v89, %v89
    %v98 = vcombine.high %v96, %v96
    %v107 = vpack.c.bf16 %v72, %v72
    %v108 = vpack.c.bf16 %v80, %v80
    %v109 = vpack.c.bf16 %v79, %v79
    %v110 = vpack.c.bf16 %v81, %v81
    %v111 = vpack.c.bf16 %v89, %v89
    %v112 = vpack.c.bf16 %v97, %v97
    %v113 = vpack.c.bf16 %v96, %v96
    %v114 = vpack.c.bf16 %v98, %v98
    %v115 = vld [vmem:[#allocation5] sm:$0xff]
    %v116 = vld [vmem:[#allocation5 + $0x8] sm:$0xff]
    %v117 = vld [vmem:[#allocation5 + $0x10] sm:$0xff]
    %v118 = vld [vmem:[#allocation5 + $0x18] sm:$0xff]
    %v119 = vld [vmem:[#allocation5 + $0x20] sm:$0xff]
    %v120 = vld [vmem:[#allocation5 + $0x28] sm:$0xff]
    %v121 = vld [vmem:[#allocation5 + $0x30] sm:$0xff]
    %v122 = vld [vmem:[#allocation5 + $0x38] sm:$0xff]
    %v123 = vld [vmem:[#allocation5 + $0x40] sm:$0xff]
    %v124 = vld [vmem:[#allocation5 + $0x48] sm:$0xff]
    %v125 = vld [vmem:[#allocation5 + $0x50] sm:$0xff]
    %v126 = vld [vmem:[#allocation5 + $0x58] sm:$0xff]
    %v127 = vld [vmem:[#allocation5 + $0x60] sm:$0xff]
    %v128 = vld [vmem:[#allocation5 + $0x68] sm:$0xff]
    %v129 = vld [vmem:[#allocation5 + $0x70] sm:$0xff]
    %v130 = vld [vmem:[#allocation5 + $0x78] sm:$0xff]
    %v131 = vld [vmem:[#allocation5 + $0x80] sm:$0xff]
    %v132 = vld [vmem:[#allocation5 + $0x88] sm:$0xff]
    %v133 = vld [vmem:[#allocation5 + $0x90] sm:$0xff]
    %v134 = vld [vmem:[#allocation5 + $0x98] sm:$0xff]
    %v135 = vld [vmem:[#allocation5 + $0xa0] sm:$0xff]
    %v136 = vld [vmem:[#allocation5 + $0xa8] sm:$0xff]
    %v137 = vld [vmem:[#allocation5 + $0xb0] sm:$0xff]
    %v138 = vld [vmem:[#allocation5 + $0xb8] sm:$0xff]
    %v139 = vld [vmem:[#allocation5 + $0xc0] sm:$0xff]
    %v140 = vld [vmem:[#allocation5 + $0xc8] sm:$0xff]
    %v141 = vld [vmem:[#allocation5 + $0xd0] sm:$0xff]
    %v142 = vld [vmem:[#allocation5 + $0xd8] sm:$0xff]
    %v143 = vld [vmem:[#allocation5 + $0xe0] sm:$0xff]
    %v144 = vld [vmem:[#allocation5 + $0xe8] sm:$0xff]
    %v145 = vld [vmem:[#allocation5 + $0xf0] sm:$0xff]
    %v146 = vld [vmem:[#allocation5 + $0xf8] sm:$0xff]
    %v147 = vld [vmem:[#allocation5 + $0x100] sm:$0xff]
    %v148 = vld [vmem:[#allocation5 + $0x108] sm:$0xff]
    %v149 = vld [vmem:[#allocation5 + $0x110] sm:$0xff]
    %v150 = vld [vmem:[#allocation5 + $0x118] sm:$0xff]
    %v151 = vld [vmem:[#allocation5 + $0x120] sm:$0xff]
    %v152 = vld [vmem:[#allocation5 + $0x128] sm:$0xff]
    %v153 = vld [vmem:[#allocation5 + $0x130] sm:$0xff]
    %v154 = vld [vmem:[#allocation5 + $0x138] sm:$0xff]
    %v155 = vld [vmem:[#allocation5 + $0x140] sm:$0xff]
    %v156 = vld [vmem:[#allocation5 + $0x148] sm:$0xff]
    %v157 = vld [vmem:[#allocation5 + $0x150] sm:$0xff]
    %v158 = vld [vmem:[#allocation5 + $0x158] sm:$0xff]
    %v159 = vld [vmem:[#allocation5 + $0x160] sm:$0xff]
    %v160 = vld [vmem:[#allocation5 + $0x168] sm:$0xff]
    %v161 = vld [vmem:[#allocation5 + $0x170] sm:$0xff]
    %v162 = vld [vmem:[#allocation5 + $0x178] sm:$0xff]
    %v163 = vld [vmem:[#allocation5 + $0x180] sm:$0xff]
    %v164 = vld [vmem:[#allocation5 + $0x188] sm:$0xff]
    %v165 = vld [vmem:[#allocation5 + $0x190] sm:$0xff]
    %v166 = vld [vmem:[#allocation5 + $0x198] sm:$0xff]
    %v167 = vld [vmem:[#allocation5 + $0x1a0] sm:$0xff]
    %v168 = vld [vmem:[#allocation5 + $0x1a8] sm:$0xff]
    %v169 = vld [vmem:[#allocation5 + $0x1b0] sm:$0xff]
    %v170 = vld [vmem:[#allocation5 + $0x1b8] sm:$0xff]
    %v171 = vld [vmem:[#allocation5 + $0x1c0] sm:$0xff]
    %v172 = vld [vmem:[#allocation5 + $0x1c8] sm:$0xff]
    %v173 = vld [vmem:[#allocation5 + $0x1d0] sm:$0xff]
    %v174 = vld [vmem:[#allocation5 + $0x1d8] sm:$0xff]
    %v175 = vld [vmem:[#allocation5 + $0x1e0] sm:$0xff]
    %v176 = vld [vmem:[#allocation5 + $0x1e8] sm:$0xff]
    %v177 = vld [vmem:[#allocation5 + $0x1f0] sm:$0xff]
    %v178 = vld [vmem:[#allocation5 + $0x1f8] sm:$0xff]
    %v179 = vld [vmem:[#allocation5 + $0x200] sm:$0xff]
    %v180 = vld [vmem:[#allocation5 + $0x208] sm:$0xff]
    %v181 = vld [vmem:[#allocation5 + $0x210] sm:$0xff]
    %v182 = vld [vmem:[#allocation5 + $0x218] sm:$0xff]
    %v183 = vld [vmem:[#allocation5 + $0x220] sm:$0xff]
    %v184 = vld [vmem:[#allocation5 + $0x228] sm:$0xff]
    %v185 = vld [vmem:[#allocation5 + $0x230] sm:$0xff]
    %v186 = vld [vmem:[#allocation5 + $0x238] sm:$0xff]
    %v187 = vld [vmem:[#allocation5 + $0x240] sm:$0xff]
    %v188 = vld [vmem:[#allocation5 + $0x248] sm:$0xff]
    %v189 = vld [vmem:[#allocation5 + $0x250] sm:$0xff]
    %v190 = vld [vmem:[#allocation5 + $0x258] sm:$0xff]
    %v191 = vld [vmem:[#allocation5 + $0x260] sm:$0xff]
    %v192 = vld [vmem:[#allocation5 + $0x268] sm:$0xff]
    %v193 = vld [vmem:[#allocation5 + $0x270] sm:$0xff]
    %v194 = vld [vmem:[#allocation5 + $0x278] sm:$0xff]
    %v195 = vld [vmem:[#allocation5 + $0x280] sm:$0xff]
    %v196 = vld [vmem:[#allocation5 + $0x288] sm:$0xff]
    %v197 = vld [vmem:[#allocation5 + $0x290] sm:$0xff]
    %v198 = vld [vmem:[#allocation5 + $0x298] sm:$0xff]
    %v199 = vld [vmem:[#allocation5 + $0x2a0] sm:$0xff]
    %v200 = vld [vmem:[#allocation5 + $0x2a8] sm:$0xff]
    %v201 = vld [vmem:[#allocation5 + $0x2b0] sm:$0xff]
    %v202 = vld [vmem:[#allocation5 + $0x2b8] sm:$0xff]
    %v203 = vld [vmem:[#allocation5 + $0x2c0] sm:$0xff]
    %v204 = vld [vmem:[#allocation5 + $0x2c8] sm:$0xff]
    %v205 = vld [vmem:[#allocation5 + $0x2d0] sm:$0xff]
    %v206 = vld [vmem:[#allocation5 + $0x2d8] sm:$0xff]
    %v207 = vld [vmem:[#allocation5 + $0x2e0] sm:$0xff]
    %v208 = vld [vmem:[#allocation5 + $0x2e8] sm:$0xff]
    %v209 = vld [vmem:[#allocation5 + $0x2f0] sm:$0xff]
    %v210 = vld [vmem:[#allocation5 + $0x2f8] sm:$0xff]
    %v211 = vld [vmem:[#allocation5 + $0x300] sm:$0xff]
    %v212 = vld [vmem:[#allocation5 + $0x308] sm:$0xff]
    %v213 = vld [vmem:[#allocation5 + $0x310] sm:$0xff]
    %v214 = vld [vmem:[#allocation5 + $0x318] sm:$0xff]
    %v215 = vld [vmem:[#allocation5 + $0x320] sm:$0xff]
    %v216 = vld [vmem:[#allocation5 + $0x328] sm:$0xff]
    %v217 = vld [vmem:[#allocation5 + $0x330] sm:$0xff]
    %v218 = vld [vmem:[#allocation5 + $0x338] sm:$0xff]
    %v219 = vld [vmem:[#allocation5 + $0x340] sm:$0xff]
    %v220 = vld [vmem:[#allocation5 + $0x348] sm:$0xff]
    %v221 = vld [vmem:[#allocation5 + $0x350] sm:$0xff]
    %v222 = vld [vmem:[#allocation5 + $0x358] sm:$0xff]
    %v223 = vld [vmem:[#allocation5 + $0x360] sm:$0xff]
    %v224 = vld [vmem:[#allocation5 + $0x368] sm:$0xff]
    %v225 = vld [vmem:[#allocation5 + $0x370] sm:$0xff]
    %v226 = vld [vmem:[#allocation5 + $0x378] sm:$0xff]
    %v227 = vld [vmem:[#allocation5 + $0x380] sm:$0xff]
    %v228 = vld [vmem:[#allocation5 + $0x388] sm:$0xff]
    %v229 = vld [vmem:[#allocation5 + $0x390] sm:$0xff]
    %v230 = vld [vmem:[#allocation5 + $0x398] sm:$0xff]
    %v231 = vld [vmem:[#allocation5 + $0x3a0] sm:$0xff]
    %v232 = vld [vmem:[#allocation5 + $0x3a8] sm:$0xff]
    %v233 = vld [vmem:[#allocation5 + $0x3b0] sm:$0xff]
    %v234 = vld [vmem:[#allocation5 + $0x3b8] sm:$0xff]
    %v235 = vld [vmem:[#allocation5 + $0x3c0] sm:$0xff]
    %v236 = vld [vmem:[#allocation5 + $0x3c8] sm:$0xff]
    %v237 = vld [vmem:[#allocation5 + $0x3d0] sm:$0xff]
    %v238 = vld [vmem:[#allocation5 + $0x3d8] sm:$0xff]
    %v239 = vld [vmem:[#allocation5 + $0x3e0] sm:$0xff]
    %v240 = vld [vmem:[#allocation5 + $0x3e8] sm:$0xff]
    %v241 = vld [vmem:[#allocation5 + $0x3f0] sm:$0xff]
    %v242 = vld [vmem:[#allocation5 + $0x3f8] sm:$0xff]
    %v243 = vld [vmem:[#allocation5 + $0x400] sm:$0xff]
    %v244 = vld [vmem:[#allocation5 + $0x408] sm:$0xff]
    %v245 = vld [vmem:[#allocation5 + $0x410] sm:$0xff]
    %v246 = vld [vmem:[#allocation5 + $0x418] sm:$0xff]
    %v247 = vld [vmem:[#allocation5 + $0x420] sm:$0xff]
    %v248 = vld [vmem:[#allocation5 + $0x428] sm:$0xff]
    %v249 = vld [vmem:[#allocation5 + $0x430] sm:$0xff]
    %v250 = vld [vmem:[#allocation5 + $0x438] sm:$0xff]
    %v251 = vld [vmem:[#allocation5 + $0x440] sm:$0xff]
    %v252 = vld [vmem:[#allocation5 + $0x448] sm:$0xff]
    %v253 = vld [vmem:[#allocation5 + $0x450] sm:$0xff]
    %v254 = vld [vmem:[#allocation5 + $0x458] sm:$0xff]
    %v255 = vld [vmem:[#allocation5 + $0x460] sm:$0xff]
    %v256 = vld [vmem:[#allocation5 + $0x468] sm:$0xff]
    %v257 = vld [vmem:[#allocation5 + $0x470] sm:$0xff]
    %v258 = vld [vmem:[#allocation5 + $0x478] sm:$0xff]
    %v259 = vld [vmem:[#allocation5 + $0x480] sm:$0xff]
    %v260 = vld [vmem:[#allocation5 + $0x488] sm:$0xff]
    %v261 = vld [vmem:[#allocation5 + $0x490] sm:$0xff]
    %v262 = vld [vmem:[#allocation5 + $0x498] sm:$0xff]
    %v263 = vld [vmem:[#allocation5 + $0x4a0] sm:$0xff]
    %v264 = vld [vmem:[#allocation5 + $0x4a8] sm:$0xff]
    %v265 = vld [vmem:[#allocation5 + $0x4b0] sm:$0xff]
    %v266 = vld [vmem:[#allocation5 + $0x4b8] sm:$0xff]
    %v267 = vld [vmem:[#allocation5 + $0x4c0] sm:$0xff]
    %v268 = vld [vmem:[#allocation5 + $0x4c8] sm:$0xff]
    %v269 = vld [vmem:[#allocation5 + $0x4d0] sm:$0xff]
    %v270 = vld [vmem:[#allocation5 + $0x4d8] sm:$0xff]
    %v271 = vld [vmem:[#allocation5 + $0x4e0] sm:$0xff]
    %v272 = vld [vmem:[#allocation5 + $0x4e8] sm:$0xff]
    %v273 = vld [vmem:[#allocation5 + $0x4f0] sm:$0xff]
    %v274 = vld [vmem:[#allocation5 + $0x4f8] sm:$0xff]
    %v275 = vld [vmem:[#allocation5 + $0x500] sm:$0xff]
    %v276 = vld [vmem:[#allocation5 + $0x508] sm:$0xff]
    %v277 = vld [vmem:[#allocation5 + $0x510] sm:$0xff]
    %v278 = vld [vmem:[#allocation5 + $0x518] sm:$0xff]
    %v279 = vld [vmem:[#allocation5 + $0x520] sm:$0xff]
    %v280 = vld [vmem:[#allocation5 + $0x528] sm:$0xff]
    %v281 = vld [vmem:[#allocation5 + $0x530] sm:$0xff]
    %v282 = vld [vmem:[#allocation5 + $0x538] sm:$0xff]
    %v283 = vld [vmem:[#allocation5 + $0x540] sm:$0xff]
    %v284 = vld [vmem:[#allocation5 + $0x548] sm:$0xff]
    %v285 = vld [vmem:[#allocation5 + $0x550] sm:$0xff]
    %v286 = vld [vmem:[#allocation5 + $0x558] sm:$0xff]
    %v287 = vld [vmem:[#allocation5 + $0x560] sm:$0xff]
    %v288 = vld [vmem:[#allocation5 + $0x568] sm:$0xff]
    %v289 = vld [vmem:[#allocation5 + $0x570] sm:$0xff]
    %v290 = vld [vmem:[#allocation5 + $0x578] sm:$0xff]
    %v291 = vld [vmem:[#allocation5 + $0x580] sm:$0xff]
    %v292 = vld [vmem:[#allocation5 + $0x588] sm:$0xff]
    %v293 = vld [vmem:[#allocation5 + $0x590] sm:$0xff]
    %v294 = vld [vmem:[#allocation5 + $0x598] sm:$0xff]
    %v295 = vld [vmem:[#allocation5 + $0x5a0] sm:$0xff]
    %v296 = vld [vmem:[#allocation5 + $0x5a8] sm:$0xff]
    %v297 = vld [vmem:[#allocation5 + $0x5b0] sm:$0xff]
    %v298 = vld [vmem:[#allocation5 + $0x5b8] sm:$0xff]
    %v299 = vld [vmem:[#allocation5 + $0x5c0] sm:$0xff]
    %v300 = vld [vmem:[#allocation5 + $0x5c8] sm:$0xff]
    %v301 = vld [vmem:[#allocation5 + $0x5d0] sm:$0xff]
    %v302 = vld [vmem:[#allocation5 + $0x5d8] sm:$0xff]
    %v303 = vld [vmem:[#allocation5 + $0x5e0] sm:$0xff]
    %v304 = vld [vmem:[#allocation5 + $0x5e8] sm:$0xff]
    %v305 = vld [vmem:[#allocation5 + $0x5f0] sm:$0xff]
    %v306 = vld [vmem:[#allocation5 + $0x5f8] sm:$0xff]
    %v307 = vld [vmem:[#allocation5 + $0x600] sm:$0xff]
    %v308 = vld [vmem:[#allocation5 + $0x608] sm:$0xff]
    %v309 = vld [vmem:[#allocation5 + $0x610] sm:$0xff]
    %v310 = vld [vmem:[#allocation5 + $0x618] sm:$0xff]
    %v311 = vld [vmem:[#allocation5 + $0x620] sm:$0xff]
    %v312 = vld [vmem:[#allocation5 + $0x628] sm:$0xff]
    %v313 = vld [vmem:[#allocation5 + $0x630] sm:$0xff]
    %v314 = vld [vmem:[#allocation5 + $0x638] sm:$0xff]
    %v315 = vld [vmem:[#allocation5 + $0x640] sm:$0xff]
    %v316 = vld [vmem:[#allocation5 + $0x648] sm:$0xff]
    %v317 = vld [vmem:[#allocation5 + $0x650] sm:$0xff]
    %v318 = vld [vmem:[#allocation5 + $0x658] sm:$0xff]
    %v319 = vld [vmem:[#allocation5 + $0x660] sm:$0xff]
    %v320 = vld [vmem:[#allocation5 + $0x668] sm:$0xff]
    %v321 = vld [vmem:[#allocation5 + $0x670] sm:$0xff]
    %v322 = vld [vmem:[#allocation5 + $0x678] sm:$0xff]
    %v323 = vld [vmem:[#allocation5 + $0x680] sm:$0xff]
    %v324 = vld [vmem:[#allocation5 + $0x688] sm:$0xff]
    %v325 = vld [vmem:[#allocation5 + $0x690] sm:$0xff]
    %v326 = vld [vmem:[#allocation5 + $0x698] sm:$0xff]
    %v327 = vld [vmem:[#allocation5 + $0x6a0] sm:$0xff]
    %v328 = vld [vmem:[#allocation5 + $0x6a8] sm:$0xff]
    %v329 = vld [vmem:[#allocation5 + $0x6b0] sm:$0xff]
    %v330 = vld [vmem:[#allocation5 + $0x6b8] sm:$0xff]
    %v331 = vld [vmem:[#allocation5 + $0x6c0] sm:$0xff]
    %v332 = vld [vmem:[#allocation5 + $0x6c8] sm:$0xff]
    %v333 = vld [vmem:[#allocation5 + $0x6d0] sm:$0xff]
    %v334 = vld [vmem:[#allocation5 + $0x6d8] sm:$0xff]
    %v335 = vld [vmem:[#allocation5 + $0x6e0] sm:$0xff]
    %v336 = vld [vmem:[#allocation5 + $0x6e8] sm:$0xff]
    %v337 = vld [vmem:[#allocation5 + $0x6f0] sm:$0xff]
    %v338 = vld [vmem:[#allocation5 + $0x6f8] sm:$0xff]
    %v339 = vld [vmem:[#allocation5 + $0x700] sm:$0xff]
    %v340 = vld [vmem:[#allocation5 + $0x708] sm:$0xff]
    %v341 = vld [vmem:[#allocation5 + $0x710] sm:$0xff]
    %v342 = vld [vmem:[#allocation5 + $0x718] sm:$0xff]
    %v343 = vld [vmem:[#allocation5 + $0x720] sm:$0xff]
    %v344 = vld [vmem:[#allocation5 + $0x728] sm:$0xff]
    %v345 = vld [vmem:[#allocation5 + $0x730] sm:$0xff]
    %v346 = vld [vmem:[#allocation5 + $0x738] sm:$0xff]
    %v347 = vld [vmem:[#allocation5 + $0x740] sm:$0xff]
    %v348 = vld [vmem:[#allocation5 + $0x748] sm:$0xff]
    %v349 = vld [vmem:[#allocation5 + $0x750] sm:$0xff]
    %v350 = vld [vmem:[#allocation5 + $0x758] sm:$0xff]
    %v351 = vld [vmem:[#allocation5 + $0x760] sm:$0xff]
    %v352 = vld [vmem:[#allocation5 + $0x768] sm:$0xff]
    %v353 = vld [vmem:[#allocation5 + $0x770] sm:$0xff]
    %v354 = vld [vmem:[#allocation5 + $0x778] sm:$0xff]
    %v355 = vld [vmem:[#allocation5 + $0x780] sm:$0xff]
    %v356 = vld [vmem:[#allocation5 + $0x788] sm:$0xff]
    %v357 = vld [vmem:[#allocation5 + $0x790] sm:$0xff]
    %v358 = vld [vmem:[#allocation5 + $0x798] sm:$0xff]
    %v359 = vld [vmem:[#allocation5 + $0x7a0] sm:$0xff]
    %v360 = vld [vmem:[#allocation5 + $0x7a8] sm:$0xff]
    %v361 = vld [vmem:[#allocation5 + $0x7b0] sm:$0xff]
    %v362 = vld [vmem:[#allocation5 + $0x7b8] sm:$0xff]
    %v363 = vld [vmem:[#allocation5 + $0x7c0] sm:$0xff]
    %v364 = vld [vmem:[#allocation5 + $0x7c8] sm:$0xff]
    %v365 = vld [vmem:[#allocation5 + $0x7d0] sm:$0xff]
    %v366 = vld [vmem:[#allocation5 + $0x7d8] sm:$0xff]
    %v367 = vld [vmem:[#allocation5 + $0x7e0] sm:$0xff]
    %v368 = vld [vmem:[#allocation5 + $0x7e8] sm:$0xff]
    %v369 = vld [vmem:[#allocation5 + $0x7f0] sm:$0xff]
    %v370 = vld [vmem:[#allocation5 + $0x7f8] sm:$0xff]
    %v371 = vld [vmem:[%s2] sm:$0xf]
    %v373 = vlaneseq
    %v374 = vshrl.u32 %v373, 7
    %v375 = vsub.s32 0, %v374
    %v376 = vrot.slane %v371, %v375
    %v377 = vlaneseq
    %v378 = vshrl.u32 %v377, 7
    %v379 = vsub.s32 1, %v378
    %v380 = vrot.slane %v371, %v379
    %v381 = vlaneseq
    %v382 = vshrl.u32 %v381, 7
    %v383 = vsub.s32 2, %v382
    %v384 = vrot.slane %v371, %v383
    %v385 = vlaneseq
    %v386 = vshrl.u32 %v385, 7
    %v387 = vsub.s32 3, %v386
    %v388 = vrot.slane %v371, %v387
    %v649 = vunpack.c.l.b16 %v115
    %v650 = vunpack.c.h.b16 %v115
    %v651 = vunpack.c.l.b16 %v116
    %v652 = vunpack.c.h.b16 %v116
    %v653 = vunpack.c.l.b16 %v117
    %v654 = vunpack.c.h.b16 %v117
    %v655 = vunpack.c.l.b16 %v118
    %v656 = vunpack.c.h.b16 %v118
    %v657 = vunpack.c.l.b16 %v119
    %v658 = vunpack.c.h.b16 %v119
    %v659 = vunpack.c.l.b16 %v120
    %v660 = vunpack.c.h.b16 %v120
    %v661 = vunpack.c.l.b16 %v121
    %v662 = vunpack.c.h.b16 %v121
    %v663 = vunpack.c.l.b16 %v122
    %v664 = vunpack.c.h.b16 %v122
    %v665 = vunpack.c.l.b16 %v123
    %v666 = vunpack.c.h.b16 %v123
    %v667 = vunpack.c.l.b16 %v124
    %v668 = vunpack.c.h.b16 %v124
    %v669 = vunpack.c.l.b16 %v125
    %v670 = vunpack.c.h.b16 %v125
    %v671 = vunpack.c.l.b16 %v126
    %v672 = vunpack.c.h.b16 %v126
    %v673 = vunpack.c.l.b16 %v127
    %v674 = vunpack.c.h.b16 %v127
    %v675 = vunpack.c.l.b16 %v128
    %v676 = vunpack.c.h.b16 %v128
    %v677 = vunpack.c.l.b16 %v129
    %v678 = vunpack.c.h.b16 %v129
    %v679 = vunpack.c.l.b16 %v130
    %v680 = vunpack.c.h.b16 %v130
    %v681 = vunpack.c.l.b16 %v131
    %v682 = vunpack.c.h.b16 %v131
    %v683 = vunpack.c.l.b16 %v132
    %v684 = vunpack.c.h.b16 %v132
    %v685 = vunpack.c.l.b16 %v133
    %v686 = vunpack.c.h.b16 %v133
    %v687 = vunpack.c.l.b16 %v134
    %v688 = vunpack.c.h.b16 %v134
    %v689 = vunpack.c.l.b16 %v135
    %v690 = vunpack.c.h.b16 %v135
    %v691 = vunpack.c.l.b16 %v136
    %v692 = vunpack.c.h.b16 %v136
    %v693 = vunpack.c.l.b16 %v137
    %v694 = vunpack.c.h.b16 %v137
    %v695 = vunpack.c.l.b16 %v138
    %v696 = vunpack.c.h.b16 %v138
    %v697 = vunpack.c.l.b16 %v139
    %v698 = vunpack.c.h.b16 %v139
    %v699 = vunpack.c.l.b16 %v140
    %v700 = vunpack.c.h.b16 %v140
    %v701 = vunpack.c.l.b16 %v141
    %v702 = vunpack.c.h.b16 %v141
    %v703 = vunpack.c.l.b16 %v142
    %v704 = vunpack.c.h.b16 %v142
    %v705 = vunpack.c.l.b16 %v143
    %v706 = vunpack.c.h.b16 %v143
    %v707 = vunpack.c.l.b16 %v144
    %v708 = vunpack.c.h.b16 %v144
    %v709 = vunpack.c.l.b16 %v145
    %v710 = vunpack.c.h.b16 %v145
    %v711 = vunpack.c.l.b16 %v146
    %v712 = vunpack.c.h.b16 %v146
    %v713 = vunpack.c.l.b16 %v147
    %v714 = vunpack.c.h.b16 %v147
    %v715 = vunpack.c.l.b16 %v148
    %v716 = vunpack.c.h.b16 %v148
    %v717 = vunpack.c.l.b16 %v149
    %v718 = vunpack.c.h.b16 %v149
    %v719 = vunpack.c.l.b16 %v150
    %v720 = vunpack.c.h.b16 %v150
    %v721 = vunpack.c.l.b16 %v151
    %v722 = vunpack.c.h.b16 %v151
    %v723 = vunpack.c.l.b16 %v152
    %v724 = vunpack.c.h.b16 %v152
    %v725 = vunpack.c.l.b16 %v153
    %v726 = vunpack.c.h.b16 %v153
    %v727 = vunpack.c.l.b16 %v154
    %v728 = vunpack.c.h.b16 %v154
    %v729 = vunpack.c.l.b16 %v155
    %v730 = vunpack.c.h.b16 %v155
    %v731 = vunpack.c.l.b16 %v156
    %v732 = vunpack.c.h.b16 %v156
    %v733 = vunpack.c.l.b16 %v157
    %v734 = vunpack.c.h.b16 %v157
    %v735 = vunpack.c.l.b16 %v158
    %v736 = vunpack.c.h.b16 %v158
    %v737 = vunpack.c.l.b16 %v159
    %v738 = vunpack.c.h.b16 %v159
    %v739 = vunpack.c.l.b16 %v160
    %v740 = vunpack.c.h.b16 %v160
    %v741 = vunpack.c.l.b16 %v161
    %v742 = vunpack.c.h.b16 %v161
    %v743 = vunpack.c.l.b16 %v162
    %v744 = vunpack.c.h.b16 %v162
    %v745 = vunpack.c.l.b16 %v163
    %v746 = vunpack.c.h.b16 %v163
    %v747 = vunpack.c.l.b16 %v164
    %v748 = vunpack.c.h.b16 %v164
    %v749 = vunpack.c.l.b16 %v165
    %v750 = vunpack.c.h.b16 %v165
    %v751 = vunpack.c.l.b16 %v166
    %v752 = vunpack.c.h.b16 %v166
    %v753 = vunpack.c.l.b16 %v167
    %v754 = vunpack.c.h.b16 %v167
    %v755 = vunpack.c.l.b16 %v168
    %v756 = vunpack.c.h.b16 %v168
    %v757 = vunpack.c.l.b16 %v169
    %v758 = vunpack.c.h.b16 %v169
    %v759 = vunpack.c.l.b16 %v170
    %v760 = vunpack.c.h.b16 %v170
    %v761 = vunpack.c.l.b16 %v171
    %v762 = vunpack.c.h.b16 %v171
    %v763 = vunpack.c.l.b16 %v172
    %v764 = vunpack.c.h.b16 %v172
    %v765 = vunpack.c.l.b16 %v173
    %v766 = vunpack.c.h.b16 %v173
    %v767 = vunpack.c.l.b16 %v174
    %v768 = vunpack.c.h.b16 %v174
    %v769 = vunpack.c.l.b16 %v175
    %v770 = vunpack.c.h.b16 %v175
    %v771 = vunpack.c.l.b16 %v176
    %v772 = vunpack.c.h.b16 %v176
    %v773 = vunpack.c.l.b16 %v177
    %v774 = vunpack.c.h.b16 %v177
    %v775 = vunpack.c.l.b16 %v178
    %v776 = vunpack.c.h.b16 %v178
    %v777 = vunpack.c.l.b16 %v179
    %v778 = vunpack.c.h.b16 %v179
    %v779 = vunpack.c.l.b16 %v180
    %v780 = vunpack.c.h.b16 %v180
    %v781 = vunpack.c.l.b16 %v181
    %v782 = vunpack.c.h.b16 %v181
    %v783 = vunpack.c.l.b16 %v182
    %v784 = vunpack.c.h.b16 %v182
    %v785 = vunpack.c.l.b16 %v183
    %v786 = vunpack.c.h.b16 %v183
    %v787 = vunpack.c.l.b16 %v184
    %v788 = vunpack.c.h.b16 %v184
    %v789 = vunpack.c.l.b16 %v185
    %v790 = vunpack.c.h.b16 %v185
    %v791 = vunpack.c.l.b16 %v186
    %v792 = vunpack.c.h.b16 %v186
    %v793 = vunpack.c.l.b16 %v187
    %v794 = vunpack.c.h.b16 %v187
    %v795 = vunpack.c.l.b16 %v188
    %v796 = vunpack.c.h.b16 %v188
    %v797 = vunpack.c.l.b16 %v189
    %v798 = vunpack.c.h.b16 %v189
    %v799 = vunpack.c.l.b16 %v190
    %v800 = vunpack.c.h.b16 %v190
    %v801 = vunpack.c.l.b16 %v191
    %v802 = vunpack.c.h.b16 %v191
    %v803 = vunpack.c.l.b16 %v192
    %v804 = vunpack.c.h.b16 %v192
    %v805 = vunpack.c.l.b16 %v193
    %v806 = vunpack.c.h.b16 %v193
    %v807 = vunpack.c.l.b16 %v194
    %v808 = vunpack.c.h.b16 %v194
    %v809 = vunpack.c.l.b16 %v195
    %v810 = vunpack.c.h.b16 %v195
    %v811 = vunpack.c.l.b16 %v196
    %v812 = vunpack.c.h.b16 %v196
    %v813 = vunpack.c.l.b16 %v197
    %v814 = vunpack.c.h.b16 %v197
    %v815 = vunpack.c.l.b16 %v198
    %v816 = vunpack.c.h.b16 %v198
    %v817 = vunpack.c.l.b16 %v199
    %v818 = vunpack.c.h.b16 %v199
    %v819 = vunpack.c.l.b16 %v200
    %v820 = vunpack.c.h.b16 %v200
    %v821 = vunpack.c.l.b16 %v201
    %v822 = vunpack.c.h.b16 %v201
    %v823 = vunpack.c.l.b16 %v202
    %v824 = vunpack.c.h.b16 %v202
    %v825 = vunpack.c.l.b16 %v203
    %v826 = vunpack.c.h.b16 %v203
    %v827 = vunpack.c.l.b16 %v204
    %v828 = vunpack.c.h.b16 %v204
    %v829 = vunpack.c.l.b16 %v205
    %v830 = vunpack.c.h.b16 %v205
    %v831 = vunpack.c.l.b16 %v206
    %v832 = vunpack.c.h.b16 %v206
    %v833 = vunpack.c.l.b16 %v207
    %v834 = vunpack.c.h.b16 %v207
    %v835 = vunpack.c.l.b16 %v208
    %v836 = vunpack.c.h.b16 %v208
    %v837 = vunpack.c.l.b16 %v209
    %v838 = vunpack.c.h.b16 %v209
    %v839 = vunpack.c.l.b16 %v210
    %v840 = vunpack.c.h.b16 %v210
    %v841 = vunpack.c.l.b16 %v211
    %v842 = vunpack.c.h.b16 %v211
    %v843 = vunpack.c.l.b16 %v212
    %v844 = vunpack.c.h.b16 %v212
    %v845 = vunpack.c.l.b16 %v213
    %v846 = vunpack.c.h.b16 %v213
    %v847 = vunpack.c.l.b16 %v214
    %v848 = vunpack.c.h.b16 %v214
    %v849 = vunpack.c.l.b16 %v215
    %v850 = vunpack.c.h.b16 %v215
    %v851 = vunpack.c.l.b16 %v216
    %v852 = vunpack.c.h.b16 %v216
    %v853 = vunpack.c.l.b16 %v217
    %v854 = vunpack.c.h.b16 %v217
    %v855 = vunpack.c.l.b16 %v218
    %v856 = vunpack.c.h.b16 %v218
    %v857 = vunpack.c.l.b16 %v219
    %v858 = vunpack.c.h.b16 %v219
    %v859 = vunpack.c.l.b16 %v220
    %v860 = vunpack.c.h.b16 %v220
    %v861 = vunpack.c.l.b16 %v221
    %v862 = vunpack.c.h.b16 %v221
    %v863 = vunpack.c.l.b16 %v222
    %v864 = vunpack.c.h.b16 %v222
    %v865 = vunpack.c.l.b16 %v223
    %v866 = vunpack.c.h.b16 %v223
    %v867 = vunpack.c.l.b16 %v224
    %v868 = vunpack.c.h.b16 %v224
    %v869 = vunpack.c.l.b16 %v225
    %v870 = vunpack.c.h.b16 %v225
    %v871 = vunpack.c.l.b16 %v226
    %v872 = vunpack.c.h.b16 %v226
    %v873 = vunpack.c.l.b16 %v227
    %v874 = vunpack.c.h.b16 %v227
    %v875 = vunpack.c.l.b16 %v228
    %v876 = vunpack.c.h.b16 %v228
    %v877 = vunpack.c.l.b16 %v229
    %v878 = vunpack.c.h.b16 %v229
    %v879 = vunpack.c.l.b16 %v230
    %v880 = vunpack.c.h.b16 %v230
    %v881 = vunpack.c.l.b16 %v231
    %v882 = vunpack.c.h.b16 %v231
    %v883 = vunpack.c.l.b16 %v232
    %v884 = vunpack.c.h.b16 %v232
    %v885 = vunpack.c.l.b16 %v233
    %v886 = vunpack.c.h.b16 %v233
    %v887 = vunpack.c.l.b16 %v234
    %v888 = vunpack.c.h.b16 %v234
    %v889 = vunpack.c.l.b16 %v235
    %v890 = vunpack.c.h.b16 %v235
    %v891 = vunpack.c.l.b16 %v236
    %v892 = vunpack.c.h.b16 %v236
    %v893 = vunpack.c.l.b16 %v237
    %v894 = vunpack.c.h.b16 %v237
    %v895 = vunpack.c.l.b16 %v238
    %v896 = vunpack.c.h.b16 %v238
    %v897 = vunpack.c.l.b16 %v239
    %v898 = vunpack.c.h.b16 %v239
    %v899 = vunpack.c.l.b16 %v240
    %v900 = vunpack.c.h.b16 %v240
    %v901 = vunpack.c.l.b16 %v241
    %v902 = vunpack.c.h.b16 %v241
    %v903 = vunpack.c.l.b16 %v242
    %v904 = vunpack.c.h.b16 %v242
    %v905 = vunpack.c.l.b16 %v243
    %v906 = vunpack.c.h.b16 %v243
    %v907 = vunpack.c.l.b16 %v244
    %v908 = vunpack.c.h.b16 %v244
    %v909 = vunpack.c.l.b16 %v245
    %v910 = vunpack.c.h.b16 %v245
    %v911 = vunpack.c.l.b16 %v246
    %v912 = vunpack.c.h.b16 %v246
    %v913 = vunpack.c.l.b16 %v247
    %v914 = vunpack.c.h.b16 %v247
    %v915 = vunpack.c.l.b16 %v248
    %v916 = vunpack.c.h.b16 %v248
    %v917 = vunpack.c.l.b16 %v249
    %v918 = vunpack.c.h.b16 %v249
    %v919 = vunpack.c.l.b16 %v250
    %v920 = vunpack.c.h.b16 %v250
    %v921 = vunpack.c.l.b16 %v251
    %v922 = vunpack.c.h.b16 %v251
    %v923 = vunpack.c.l.b16 %v252
    %v924 = vunpack.c.h.b16 %v252
    %v925 = vunpack.c.l.b16 %v253
    %v926 = vunpack.c.h.b16 %v253
    %v927 = vunpack.c.l.b16 %v254
    %v928 = vunpack.c.h.b16 %v254
    %v929 = vunpack.c.l.b16 %v255
    %v930 = vunpack.c.h.b16 %v255
    %v931 = vunpack.c.l.b16 %v256
    %v932 = vunpack.c.h.b16 %v256
    %v933 = vunpack.c.l.b16 %v257
    %v934 = vunpack.c.h.b16 %v257
    %v935 = vunpack.c.l.b16 %v258
    %v936 = vunpack.c.h.b16 %v258
    %v937 = vunpack.c.l.b16 %v259
    %v938 = vunpack.c.h.b16 %v259
    %v939 = vunpack.c.l.b16 %v260
    %v940 = vunpack.c.h.b16 %v260
    %v941 = vunpack.c.l.b16 %v261
    %v942 = vunpack.c.h.b16 %v261
    %v943 = vunpack.c.l.b16 %v262
    %v944 = vunpack.c.h.b16 %v262
    %v945 = vunpack.c.l.b16 %v263
    %v946 = vunpack.c.h.b16 %v263
    %v947 = vunpack.c.l.b16 %v264
    %v948 = vunpack.c.h.b16 %v264
    %v949 = vunpack.c.l.b16 %v265
    %v950 = vunpack.c.h.b16 %v265
    %v951 = vunpack.c.l.b16 %v266
    %v952 = vunpack.c.h.b16 %v266
    %v953 = vunpack.c.l.b16 %v267
    %v954 = vunpack.c.h.b16 %v267
    %v955 = vunpack.c.l.b16 %v268
    %v956 = vunpack.c.h.b16 %v268
    %v957 = vunpack.c.l.b16 %v269
    %v958 = vunpack.c.h.b16 %v269
    %v959 = vunpack.c.l.b16 %v270
    %v960 = vunpack.c.h.b16 %v270
    %v961 = vunpack.c.l.b16 %v271
    %v962 = vunpack.c.h.b16 %v271
    %v963 = vunpack.c.l.b16 %v272
    %v964 = vunpack.c.h.b16 %v272
    %v965 = vunpack.c.l.b16 %v273
    %v966 = vunpack.c.h.b16 %v273
    %v967 = vunpack.c.l.b16 %v274
    %v968 = vunpack.c.h.b16 %v274
    %v969 = vunpack.c.l.b16 %v275
    %v970 = vunpack.c.h.b16 %v275
    %v971 = vunpack.c.l.b16 %v276
    %v972 = vunpack.c.h.b16 %v276
    %v973 = vunpack.c.l.b16 %v277
    %v974 = vunpack.c.h.b16 %v277
    %v975 = vunpack.c.l.b16 %v278
    %v976 = vunpack.c.h.b16 %v278
    %v977 = vunpack.c.l.b16 %v279
    %v978 = vunpack.c.h.b16 %v279
    %v979 = vunpack.c.l.b16 %v280
    %v980 = vunpack.c.h.b16 %v280
    %v981 = vunpack.c.l.b16 %v281
    %v982 = vunpack.c.h.b16 %v281
    %v983 = vunpack.c.l.b16 %v282
    %v984 = vunpack.c.h.b16 %v282
    %v985 = vunpack.c.l.b16 %v283
    %v986 = vunpack.c.h.b16 %v283
    %v987 = vunpack.c.l.b16 %v284
    %v988 = vunpack.c.h.b16 %v284
    %v989 = vunpack.c.l.b16 %v285
    %v990 = vunpack.c.h.b16 %v285
    %v991 = vunpack.c.l.b16 %v286
    %v992 = vunpack.c.h.b16 %v286
    %v993 = vunpack.c.l.b16 %v287
    %v994 = vunpack.c.h.b16 %v287
    %v995 = vunpack.c.l.b16 %v288
    %v996 = vunpack.c.h.b16 %v288
    %v997 = vunpack.c.l.b16 %v289
    %v998 = vunpack.c.h.b16 %v289
    %v999 = vunpack.c.l.b16 %v290
    %v1000 = vunpack.c.h.b16 %v290
    %v1001 = vunpack.c.l.b16 %v291
    %v1002 = vunpack.c.h.b16 %v291
    %v1003 = vunpack.c.l.b16 %v292
    %v1004 = vunpack.c.h.b16 %v292
    %v1005 = vunpack.c.l.b16 %v293
    %v1006 = vunpack.c.h.b16 %v293
    %v1007 = vunpack.c.l.b16 %v294
    %v1008 = vunpack.c.h.b16 %v294
    %v1009 = vunpack.c.l.b16 %v295
    %v1010 = vunpack.c.h.b16 %v295
    %v1011 = vunpack.c.l.b16 %v296
    %v1012 = vunpack.c.h.b16 %v296
    %v1013 = vunpack.c.l.b16 %v297
    %v1014 = vunpack.c.h.b16 %v297
    %v1015 = vunpack.c.l.b16 %v298
    %v1016 = vunpack.c.h.b16 %v298
    %v1017 = vunpack.c.l.b16 %v299
    %v1018 = vunpack.c.h.b16 %v299
    %v1019 = vunpack.c.l.b16 %v300
    %v1020 = vunpack.c.h.b16 %v300
    %v1021 = vunpack.c.l.b16 %v301
    %v1022 = vunpack.c.h.b16 %v301
    %v1023 = vunpack.c.l.b16 %v302
    %v1024 = vunpack.c.h.b16 %v302
    %v1025 = vunpack.c.l.b16 %v303
    %v1026 = vunpack.c.h.b16 %v303
    %v1027 = vunpack.c.l.b16 %v304
    %v1028 = vunpack.c.h.b16 %v304
    %v1029 = vunpack.c.l.b16 %v305
    %v1030 = vunpack.c.h.b16 %v305
    %v1031 = vunpack.c.l.b16 %v306
    %v1032 = vunpack.c.h.b16 %v306
    %v1033 = vunpack.c.l.b16 %v307
    %v1034 = vunpack.c.h.b16 %v307
    %v1035 = vunpack.c.l.b16 %v308
    %v1036 = vunpack.c.h.b16 %v308
    %v1037 = vunpack.c.l.b16 %v309
    %v1038 = vunpack.c.h.b16 %v309
    %v1039 = vunpack.c.l.b16 %v310
    %v1040 = vunpack.c.h.b16 %v310
    %v1041 = vunpack.c.l.b16 %v311
    %v1042 = vunpack.c.h.b16 %v311
    %v1043 = vunpack.c.l.b16 %v312
    %v1044 = vunpack.c.h.b16 %v312
    %v1045 = vunpack.c.l.b16 %v313
    %v1046 = vunpack.c.h.b16 %v313
    %v1047 = vunpack.c.l.b16 %v314
    %v1048 = vunpack.c.h.b16 %v314
    %v1049 = vunpack.c.l.b16 %v315
    %v1050 = vunpack.c.h.b16 %v315
    %v1051 = vunpack.c.l.b16 %v316
    %v1052 = vunpack.c.h.b16 %v316
    %v1053 = vunpack.c.l.b16 %v317
    %v1054 = vunpack.c.h.b16 %v317
    %v1055 = vunpack.c.l.b16 %v318
    %v1056 = vunpack.c.h.b16 %v318
    %v1057 = vunpack.c.l.b16 %v319
    %v1058 = vunpack.c.h.b16 %v319
    %v1059 = vunpack.c.l.b16 %v320
    %v1060 = vunpack.c.h.b16 %v320
    %v1061 = vunpack.c.l.b16 %v321
    %v1062 = vunpack.c.h.b16 %v321
    %v1063 = vunpack.c.l.b16 %v322
    %v1064 = vunpack.c.h.b16 %v322
    %v1065 = vunpack.c.l.b16 %v323
    %v1066 = vunpack.c.h.b16 %v323
    %v1067 = vunpack.c.l.b16 %v324
    %v1068 = vunpack.c.h.b16 %v324
    %v1069 = vunpack.c.l.b16 %v325
    %v1070 = vunpack.c.h.b16 %v325
    %v1071 = vunpack.c.l.b16 %v326
    %v1072 = vunpack.c.h.b16 %v326
    %v1073 = vunpack.c.l.b16 %v327
    %v1074 = vunpack.c.h.b16 %v327
    %v1075 = vunpack.c.l.b16 %v328
    %v1076 = vunpack.c.h.b16 %v328
    %v1077 = vunpack.c.l.b16 %v329
    %v1078 = vunpack.c.h.b16 %v329
    %v1079 = vunpack.c.l.b16 %v330
    %v1080 = vunpack.c.h.b16 %v330
    %v1081 = vunpack.c.l.b16 %v331
    %v1082 = vunpack.c.h.b16 %v331
    %v1083 = vunpack.c.l.b16 %v332
    %v1084 = vunpack.c.h.b16 %v332
    %v1085 = vunpack.c.l.b16 %v333
    %v1086 = vunpack.c.h.b16 %v333
    %v1087 = vunpack.c.l.b16 %v334
    %v1088 = vunpack.c.h.b16 %v334
    %v1089 = vunpack.c.l.b16 %v335
    %v1090 = vunpack.c.h.b16 %v335
    %v1091 = vunpack.c.l.b16 %v336
    %v1092 = vunpack.c.h.b16 %v336
    %v1093 = vunpack.c.l.b16 %v337
    %v1094 = vunpack.c.h.b16 %v337
    %v1095 = vunpack.c.l.b16 %v338
    %v1096 = vunpack.c.h.b16 %v338
    %v1097 = vunpack.c.l.b16 %v339
    %v1098 = vunpack.c.h.b16 %v339
    %v1099 = vunpack.c.l.b16 %v340
    %v1100 = vunpack.c.h.b16 %v340
    %v1101 = vunpack.c.l.b16 %v341
    %v1102 = vunpack.c.h.b16 %v341
    %v1103 = vunpack.c.l.b16 %v342
    %v1104 = vunpack.c.h.b16 %v342
    %v1105 = vunpack.c.l.b16 %v343
    %v1106 = vunpack.c.h.b16 %v343
    %v1107 = vunpack.c.l.b16 %v344
    %v1108 = vunpack.c.h.b16 %v344
    %v1109 = vunpack.c.l.b16 %v345
    %v1110 = vunpack.c.h.b16 %v345
    %v1111 = vunpack.c.l.b16 %v346
    %v1112 = vunpack.c.h.b16 %v346
    %v1113 = vunpack.c.l.b16 %v347
    %v1114 = vunpack.c.h.b16 %v347
    %v1115 = vunpack.c.l.b16 %v348
    %v1116 = vunpack.c.h.b16 %v348
    %v1117 = vunpack.c.l.b16 %v349
    %v1118 = vunpack.c.h.b16 %v349
    %v1119 = vunpack.c.l.b16 %v350
    %v1120 = vunpack.c.h.b16 %v350
    %v1121 = vunpack.c.l.b16 %v351
    %v1122 = vunpack.c.h.b16 %v351
    %v1123 = vunpack.c.l.b16 %v352
    %v1124 = vunpack.c.h.b16 %v352
    %v1125 = vunpack.c.l.b16 %v353
    %v1126 = vunpack.c.h.b16 %v353
    %v1127 = vunpack.c.l.b16 %v354
    %v1128 = vunpack.c.h.b16 %v354
    %v1129 = vunpack.c.l.b16 %v355
    %v1130 = vunpack.c.h.b16 %v355
    %v1131 = vunpack.c.l.b16 %v356
    %v1132 = vunpack.c.h.b16 %v356
    %v1133 = vunpack.c.l.b16 %v357
    %v1134 = vunpack.c.h.b16 %v357
    %v1135 = vunpack.c.l.b16 %v358
    %v1136 = vunpack.c.h.b16 %v358
    %v1137 = vunpack.c.l.b16 %v359
    %v1138 = vunpack.c.h.b16 %v359
    %v1139 = vunpack.c.l.b16 %v360
    %v1140 = vunpack.c.h.b16 %v360
    %v1141 = vunpack.c.l.b16 %v361
    %v1142 = vunpack.c.h.b16 %v361
    %v1143 = vunpack.c.l.b16 %v362
    %v1144 = vunpack.c.h.b16 %v362
    %v1145 = vunpack.c.l.b16 %v363
    %v1146 = vunpack.c.h.b16 %v363
    %v1147 = vunpack.c.l.b16 %v364
    %v1148 = vunpack.c.h.b16 %v364
    %v1149 = vunpack.c.l.b16 %v365
    %v1150 = vunpack.c.h.b16 %v365
    %v1151 = vunpack.c.l.b16 %v366
    %v1152 = vunpack.c.h.b16 %v366
    %v1153 = vunpack.c.l.b16 %v367
    %v1154 = vunpack.c.h.b16 %v367
    %v1155 = vunpack.c.l.b16 %v368
    %v1156 = vunpack.c.h.b16 %v368
    %v1157 = vunpack.c.l.b16 %v369
    %v1158 = vunpack.c.h.b16 %v369
    %v1159 = vunpack.c.l.b16 %v370
    %v1160 = vunpack.c.h.b16 %v370
    %v1161 = vpack.c.b16 %v653, %v649
    %v1162 = vpack.c.b16 %v654, %v650
    %v1163 = vpack.c.b16 %v655, %v651
    %v1164 = vpack.c.b16 %v656, %v652
    %v1165 = vpack.c.b16 %v661, %v657
    %v1166 = vpack.c.b16 %v662, %v658
    %v1167 = vpack.c.b16 %v663, %v659
    %v1168 = vpack.c.b16 %v664, %v660
    %v1169 = vpack.c.b16 %v669, %v665
    %v1170 = vpack.c.b16 %v670, %v666
    %v1171 = vpack.c.b16 %v671, %v667
    %v1172 = vpack.c.b16 %v672, %v668
    %v1173 = vpack.c.b16 %v677, %v673
    %v1174 = vpack.c.b16 %v678, %v674
    %v1175 = vpack.c.b16 %v679, %v675
    %v1176 = vpack.c.b16 %v680, %v676
    %v1177 = vpack.c.b16 %v685, %v681
    %v1178 = vpack.c.b16 %v686, %v682
    %v1179 = vpack.c.b16 %v687, %v683
    %v1180 = vpack.c.b16 %v688, %v684
    %v1181 = vpack.c.b16 %v693, %v689
    %v1182 = vpack.c.b16 %v694, %v690
    %v1183 = vpack.c.b16 %v695, %v691
    %v1184 = vpack.c.b16 %v696, %v692
    %v1185 = vpack.c.b16 %v701, %v697
    %v1186 = vpack.c.b16 %v702, %v698
    %v1187 = vpack.c.b16 %v703, %v699
    %v1188 = vpack.c.b16 %v704, %v700
    %v1189 = vpack.c.b16 %v709, %v705
    %v1190 = vpack.c.b16 %v710, %v706
    %v1191 = vpack.c.b16 %v711, %v707
    %v1192 = vpack.c.b16 %v712, %v708
    %v1193 = vpack.c.b16 %v717, %v713
    %v1194 = vpack.c.b16 %v718, %v714
    %v1195 = vpack.c.b16 %v719, %v715
    %v1196 = vpack.c.b16 %v720, %v716
    %v1197 = vpack.c.b16 %v725, %v721
    %v1198 = vpack.c.b16 %v726, %v722
    %v1199 = vpack.c.b16 %v727, %v723
    %v1200 = vpack.c.b16 %v728, %v724
    %v1201 = vpack.c.b16 %v733, %v729
    %v1202 = vpack.c.b16 %v734, %v730
    %v1203 = vpack.c.b16 %v735, %v731
    %v1204 = vpack.c.b16 %v736, %v732
    %v1205 = vpack.c.b16 %v741, %v737
    %v1206 = vpack.c.b16 %v742, %v738
    %v1207 = vpack.c.b16 %v743, %v739
    %v1208 = vpack.c.b16 %v744, %v740
    %v1209 = vpack.c.b16 %v749, %v745
    %v1210 = vpack.c.b16 %v750, %v746
    %v1211 = vpack.c.b16 %v751, %v747
    %v1212 = vpack.c.b16 %v752, %v748
    %v1213 = vpack.c.b16 %v757, %v753
    %v1214 = vpack.c.b16 %v758, %v754
    %v1215 = vpack.c.b16 %v759, %v755
    %v1216 = vpack.c.b16 %v760, %v756
    %v1217 = vpack.c.b16 %v765, %v761
    %v1218 = vpack.c.b16 %v766, %v762
    %v1219 = vpack.c.b16 %v767, %v763
    %v1220 = vpack.c.b16 %v768, %v764
    %v1221 = vpack.c.b16 %v773, %v769
    %v1222 = vpack.c.b16 %v774, %v770
    %v1223 = vpack.c.b16 %v775, %v771
    %v1224 = vpack.c.b16 %v776, %v772
    %v1225 = vpack.c.b16 %v781, %v777
    %v1226 = vpack.c.b16 %v782, %v778
    %v1227 = vpack.c.b16 %v783, %v779
    %v1228 = vpack.c.b16 %v784, %v780
    %v1229 = vpack.c.b16 %v789, %v785
    %v1230 = vpack.c.b16 %v790, %v786
    %v1231 = vpack.c.b16 %v791, %v787
    %v1232 = vpack.c.b16 %v792, %v788
    %v1233 = vpack.c.b16 %v797, %v793
    %v1234 = vpack.c.b16 %v798, %v794
    %v1235 = vpack.c.b16 %v799, %v795
    %v1236 = vpack.c.b16 %v800, %v796
    %v1237 = vpack.c.b16 %v805, %v801
    %v1238 = vpack.c.b16 %v806, %v802
    %v1239 = vpack.c.b16 %v807, %v803
    %v1240 = vpack.c.b16 %v808, %v804
    %v1241 = vpack.c.b16 %v813, %v809
    %v1242 = vpack.c.b16 %v814, %v810
    %v1243 = vpack.c.b16 %v815, %v811
    %v1244 = vpack.c.b16 %v816, %v812
    %v1245 = vpack.c.b16 %v821, %v817
    %v1246 = vpack.c.b16 %v822, %v818
    %v1247 = vpack.c.b16 %v823, %v819
    %v1248 = vpack.c.b16 %v824, %v820
    %v1249 = vpack.c.b16 %v829, %v825
    %v1250 = vpack.c.b16 %v830, %v826
    %v1251 = vpack.c.b16 %v831, %v827
    %v1252 = vpack.c.b16 %v832, %v828
    %v1253 = vpack.c.b16 %v837, %v833
    %v1254 = vpack.c.b16 %v838, %v834
    %v1255 = vpack.c.b16 %v839, %v835
    %v1256 = vpack.c.b16 %v840, %v836
    %v1257 = vpack.c.b16 %v845, %v841
    %v1258 = vpack.c.b16 %v846, %v842
    %v1259 = vpack.c.b16 %v847, %v843
    %v1260 = vpack.c.b16 %v848, %v844
    %v1261 = vpack.c.b16 %v853, %v849
    %v1262 = vpack.c.b16 %v854, %v850
    %v1263 = vpack.c.b16 %v855, %v851
    %v1264 = vpack.c.b16 %v856, %v852
    %v1265 = vpack.c.b16 %v861, %v857
    %v1266 = vpack.c.b16 %v862, %v858
    %v1267 = vpack.c.b16 %v863, %v859
    %v1268 = vpack.c.b16 %v864, %v860
    %v1269 = vpack.c.b16 %v869, %v865
    %v1270 = vpack.c.b16 %v870, %v866
    %v1271 = vpack.c.b16 %v871, %v867
    %v1272 = vpack.c.b16 %v872, %v868
    %v1273 = vpack.c.b16 %v877, %v873
    %v1274 = vpack.c.b16 %v878, %v874
    %v1275 = vpack.c.b16 %v879, %v875
    %v1276 = vpack.c.b16 %v880, %v876
    %v1277 = vpack.c.b16 %v885, %v881
    %v1278 = vpack.c.b16 %v886, %v882
    %v1279 = vpack.c.b16 %v887, %v883
    %v1280 = vpack.c.b16 %v888, %v884
    %v1281 = vpack.c.b16 %v893, %v889
    %v1282 = vpack.c.b16 %v894, %v890
    %v1283 = vpack.c.b16 %v895, %v891
    %v1284 = vpack.c.b16 %v896, %v892
    %v1285 = vpack.c.b16 %v901, %v897
    %v1286 = vpack.c.b16 %v902, %v898
    %v1287 = vpack.c.b16 %v903, %v899
    %v1288 = vpack.c.b16 %v904, %v900
    %v1289 = vpack.c.b16 %v909, %v905
    %v1290 = vpack.c.b16 %v910, %v906
    %v1291 = vpack.c.b16 %v911, %v907
    %v1292 = vpack.c.b16 %v912, %v908
    %v1293 = vpack.c.b16 %v917, %v913
    %v1294 = vpack.c.b16 %v918, %v914
    %v1295 = vpack.c.b16 %v919, %v915
    %v1296 = vpack.c.b16 %v920, %v916
    %v1297 = vpack.c.b16 %v925, %v921
    %v1298 = vpack.c.b16 %v926, %v922
    %v1299 = vpack.c.b16 %v927, %v923
    %v1300 = vpack.c.b16 %v928, %v924
    %v1301 = vpack.c.b16 %v933, %v929
    %v1302 = vpack.c.b16 %v934, %v930
    %v1303 = vpack.c.b16 %v935, %v931
    %v1304 = vpack.c.b16 %v936, %v932
    %v1305 = vpack.c.b16 %v941, %v937
    %v1306 = vpack.c.b16 %v942, %v938
    %v1307 = vpack.c.b16 %v943, %v939
    %v1308 = vpack.c.b16 %v944, %v940
    %v1309 = vpack.c.b16 %v949, %v945
    %v1310 = vpack.c.b16 %v950, %v946
    %v1311 = vpack.c.b16 %v951, %v947
    %v1312 = vpack.c.b16 %v952, %v948
    %v1313 = vpack.c.b16 %v957, %v953
    %v1314 = vpack.c.b16 %v958, %v954
    %v1315 = vpack.c.b16 %v959, %v955
    %v1316 = vpack.c.b16 %v960, %v956
    %v1317 = vpack.c.b16 %v965, %v961
    %v1318 = vpack.c.b16 %v966, %v962
    %v1319 = vpack.c.b16 %v967, %v963
    %v1320 = vpack.c.b16 %v968, %v964
    %v1321 = vpack.c.b16 %v973, %v969
    %v1322 = vpack.c.b16 %v974, %v970
    %v1323 = vpack.c.b16 %v975, %v971
    %v1324 = vpack.c.b16 %v976, %v972
    %v1325 = vpack.c.b16 %v981, %v977
    %v1326 = vpack.c.b16 %v982, %v978
    %v1327 = vpack.c.b16 %v983, %v979
    %v1328 = vpack.c.b16 %v984, %v980
    %v1329 = vpack.c.b16 %v989, %v985
    %v1330 = vpack.c.b16 %v990, %v986
    %v1331 = vpack.c.b16 %v991, %v987
    %v1332 = vpack.c.b16 %v992, %v988
    %v1333 = vpack.c.b16 %v997, %v993
    %v1334 = vpack.c.b16 %v998, %v994
    %v1335 = vpack.c.b16 %v999, %v995
    %v1336 = vpack.c.b16 %v1000, %v996
    %v1337 = vpack.c.b16 %v1005, %v1001
    %v1338 = vpack.c.b16 %v1006, %v1002
    %v1339 = vpack.c.b16 %v1007, %v1003
    %v1340 = vpack.c.b16 %v1008, %v1004
    %v1341 = vpack.c.b16 %v1013, %v1009
    %v1342 = vpack.c.b16 %v1014, %v1010
    %v1343 = vpack.c.b16 %v1015, %v1011
    %v1344 = vpack.c.b16 %v1016, %v1012
    %v1345 = vpack.c.b16 %v1021, %v1017
    %v1346 = vpack.c.b16 %v1022, %v1018
    %v1347 = vpack.c.b16 %v1023, %v1019
    %v1348 = vpack.c.b16 %v1024, %v1020
    %v1349 = vpack.c.b16 %v1029, %v1025
    %v1350 = vpack.c.b16 %v1030, %v1026
    %v1351 = vpack.c.b16 %v1031, %v1027
    %v1352 = vpack.c.b16 %v1032, %v1028
    %v1353 = vpack.c.b16 %v1037, %v1033
    %v1354 = vpack.c.b16 %v1038, %v1034
    %v1355 = vpack.c.b16 %v1039, %v1035
    %v1356 = vpack.c.b16 %v1040, %v1036
    %v1357 = vpack.c.b16 %v1045, %v1041
    %v1358 = vpack.c.b16 %v1046, %v1042
    %v1359 = vpack.c.b16 %v1047, %v1043
    %v1360 = vpack.c.b16 %v1048, %v1044
    %v1361 = vpack.c.b16 %v1053, %v1049
    %v1362 = vpack.c.b16 %v1054, %v1050
    %v1363 = vpack.c.b16 %v1055, %v1051
    %v1364 = vpack.c.b16 %v1056, %v1052
    %v1365 = vpack.c.b16 %v1061, %v1057
    %v1366 = vpack.c.b16 %v1062, %v1058
    %v1367 = vpack.c.b16 %v1063, %v1059
    %v1368 = vpack.c.b16 %v1064, %v1060
    %v1369 = vpack.c.b16 %v1069, %v1065
    %v1370 = vpack.c.b16 %v1070, %v1066
    %v1371 = vpack.c.b16 %v1071, %v1067
    %v1372 = vpack.c.b16 %v1072, %v1068
    %v1373 = vpack.c.b16 %v1077, %v1073
    %v1374 = vpack.c.b16 %v1078, %v1074
    %v1375 = vpack.c.b16 %v1079, %v1075
    %v1376 = vpack.c.b16 %v1080, %v1076
    %v1377 = vpack.c.b16 %v1085, %v1081
    %v1378 = vpack.c.b16 %v1086, %v1082
    %v1379 = vpack.c.b16 %v1087, %v1083
    %v1380 = vpack.c.b16 %v1088, %v1084
    %v1381 = vpack.c.b16 %v1093, %v1089
    %v1382 = vpack.c.b16 %v1094, %v1090
    %v1383 = vpack.c.b16 %v1095, %v1091
    %v1384 = vpack.c.b16 %v1096, %v1092
    %v1385 = vpack.c.b16 %v1101, %v1097
    %v1386 = vpack.c.b16 %v1102, %v1098
    %v1387 = vpack.c.b16 %v1103, %v1099
    %v1388 = vpack.c.b16 %v1104, %v1100
    %v1389 = vpack.c.b16 %v1109, %v1105
    %v1390 = vpack.c.b16 %v1110, %v1106
    %v1391 = vpack.c.b16 %v1111, %v1107
    %v1392 = vpack.c.b16 %v1112, %v1108
    %v1393 = vpack.c.b16 %v1117, %v1113
    %v1394 = vpack.c.b16 %v1118, %v1114
    %v1395 = vpack.c.b16 %v1119, %v1115
    %v1396 = vpack.c.b16 %v1120, %v1116
    %v1397 = vpack.c.b16 %v1125, %v1121
    %v1398 = vpack.c.b16 %v1126, %v1122
    %v1399 = vpack.c.b16 %v1127, %v1123
    %v1400 = vpack.c.b16 %v1128, %v1124
    %v1401 = vpack.c.b16 %v1133, %v1129
    %v1402 = vpack.c.b16 %v1134, %v1130
    %v1403 = vpack.c.b16 %v1135, %v1131
    %v1404 = vpack.c.b16 %v1136, %v1132
    %v1405 = vpack.c.b16 %v1141, %v1137
    %v1406 = vpack.c.b16 %v1142, %v1138
    %v1407 = vpack.c.b16 %v1143, %v1139
    %v1408 = vpack.c.b16 %v1144, %v1140
    %v1409 = vpack.c.b16 %v1149, %v1145
    %v1410 = vpack.c.b16 %v1150, %v1146
    %v1411 = vpack.c.b16 %v1151, %v1147
    %v1412 = vpack.c.b16 %v1152, %v1148
    %v1413 = vpack.c.b16 %v1157, %v1153
    %v1414 = vpack.c.b16 %v1158, %v1154
    %v1415 = vpack.c.b16 %v1159, %v1155
    %v1416 = vpack.c.b16 %v1160, %v1156
    %1673 = vmatprep.subr.bf16.mxu0 %v1162
    %1674 = vmatpush1.bf16.msra.mxu0 %v1161
    %1675 = vmatprep.subr.bf16.mxu0 %v1166
    %1676 = vmatpush1.bf16.msra.mxu0 %v1165
    %1677 = vmatprep.subr.bf16.mxu0 %v1170
    %1678 = vmatpush1.bf16.msra.mxu0 %v1169
    %1679 = vmatprep.subr.bf16.mxu0 %v1174
    %1680 = vmatpush1.bf16.msra.mxu0 %v1173
    %1681 = vmatprep.subr.bf16.mxu0 %v1178
    %1682 = vmatpush1.bf16.msra.mxu0 %v1177
    %1683 = vmatprep.subr.bf16.mxu0 %v1182
    %1684 = vmatpush1.bf16.msra.mxu0 %v1181
    %1685 = vmatprep.subr.bf16.mxu0 %v1186
    %1686 = vmatpush1.bf16.msra.mxu0 %v1185
    %1687 = vmatprep.subr.bf16.mxu0 %v1190
    %1688 = vmatpush1.bf16.msra.mxu0 %v1189
    %1689 = vmatprep.subr.bf16.mxu0 %v1194
    %1690 = vmatpush1.bf16.msra.mxu0 %v1193
    %1691 = vmatprep.subr.bf16.mxu0 %v1198
    %1692 = vmatpush1.bf16.msra.mxu0 %v1197
    %1693 = vmatprep.subr.bf16.mxu0 %v1202
    %1694 = vmatpush1.bf16.msra.mxu0 %v1201
    %1695 = vmatprep.subr.bf16.mxu0 %v1206
    %1696 = vmatpush1.bf16.msra.mxu0 %v1205
    %1697 = vmatprep.subr.bf16.mxu0 %v1210
    %1698 = vmatpush1.bf16.msra.mxu0 %v1209
    %1699 = vmatprep.subr.bf16.mxu0 %v1214
    %1700 = vmatpush1.bf16.msra.mxu0 %v1213
    %1701 = vmatprep.subr.bf16.mxu0 %v1218
    %1702 = vmatpush1.bf16.msra.mxu0 %v1217
    %1703 = vmatprep.subr.bf16.mxu0 %v1222
    %1704 = vmatpush1.bf16.msra.mxu0 %v1221
    %1705 = vmatprep.mubr.bf16.mxu0 %v108
    %1706 = vmatmul.mubr.bf16.gmra.mrb[0].mxu0 %v107
    %v1707 = vpop.f32.mrb[0].mxu0
    %v1708 = vadd.f32 %v376, %v1707
    %v1709 = vpop.f32.mrb[0].mxu0
    %v1710 = vadd.f32 %v380, %v1709
    %v1711 = vpop.f32.mrb[0].mxu0
    %v1712 = vpop.f32.mrb[0].mxu0
    %1713 = vdwg.mxu0
    %1714 = vmatprep.subr.bf16.mxu0 %v1226
    %1715 = vmatpush1.bf16.msra.mxu0 %v1225
    %1716 = vmatprep.subr.bf16.mxu0 %v1230
    %1717 = vmatpush1.bf16.msra.mxu0 %v1229
    %1718 = vmatprep.subr.bf16.mxu0 %v1234
    %1719 = vmatpush1.bf16.msra.mxu0 %v1233
    %1720 = vmatprep.subr.bf16.mxu0 %v1238
    %1721 = vmatpush1.bf16.msra.mxu0 %v1237
    %1722 = vmatprep.subr.bf16.mxu0 %v1242
    %1723 = vmatpush1.bf16.msra.mxu0 %v1241
    %1724 = vmatprep.subr.bf16.mxu0 %v1246
    %1725 = vmatpush1.bf16.msra.mxu0 %v1245
    %1726 = vmatprep.subr.bf16.mxu0 %v1250
    %1727 = vmatpush1.bf16.msra.mxu0 %v1249
    %1728 = vmatprep.subr.bf16.mxu0 %v1254
    %1729 = vmatpush1.bf16.msra.mxu0 %v1253
    %1730 = vmatprep.subr.bf16.mxu0 %v1258
    %1731 = vmatpush1.bf16.msra.mxu0 %v1257
    %1732 = vmatprep.subr.bf16.mxu0 %v1262
    %1733 = vmatpush1.bf16.msra.mxu0 %v1261
    %1734 = vmatprep.subr.bf16.mxu0 %v1266
    %1735 = vmatpush1.bf16.msra.mxu0 %v1265
    %1736 = vmatprep.subr.bf16.mxu0 %v1270
    %1737 = vmatpush1.bf16.msra.mxu0 %v1269
    %1738 = vmatprep.subr.bf16.mxu0 %v1274
    %1739 = vmatpush1.bf16.msra.mxu0 %v1273
    %1740 = vmatprep.subr.bf16.mxu0 %v1278
    %1741 = vmatpush1.bf16.msra.mxu0 %v1277
    %1742 = vmatprep.subr.bf16.mxu0 %v1282
    %1743 = vmatpush1.bf16.msra.mxu0 %v1281
    %1744 = vmatprep.subr.bf16.mxu0 %v1286
    %1745 = vmatpush1.bf16.msra.mxu0 %v1285
    %1746 = vmatprep.mubr.bf16.mxu0 %v110
    %1747 = vmatmul.mubr.bf16.gmra.mrb[0].mxu0 %v109
    %v1748 = vpop.f32.mrb[0].mxu0
    %v1749 = vadd.f32 %v1708, %v1748
    %v1750 = vpop.f32.mrb[0].mxu0
    %v1751 = vadd.f32 %v1710, %v1750
    %v1752 = vpop.f32.mrb[0].mxu0
    %v1753 = vpop.f32.mrb[0].mxu0
    %1754 = vdwg.mxu0
    %1755 = vmatprep.subr.bf16.mxu0 %v1290
    %1756 = vmatpush1.bf16.msra.mxu0 %v1289
    %1757 = vmatprep.subr.bf16.mxu0 %v1294
    %1758 = vmatpush1.bf16.msra.mxu0 %v1293
    %1759 = vmatprep.subr.bf16.mxu0 %v1298
    %1760 = vmatpush1.bf16.msra.mxu0 %v1297
    %1761 = vmatprep.subr.bf16.mxu0 %v1302
    %1762 = vmatpush1.bf16.msra.mxu0 %v1301
    %1763 = vmatprep.subr.bf16.mxu0 %v1306
    %1764 = vmatpush1.bf16.msra.mxu0 %v1305
    %1765 = vmatprep.subr.bf16.mxu0 %v1310
    %1766 = vmatpush1.bf16.msra.mxu0 %v1309
    %1767 = vmatprep.subr.bf16.mxu0 %v1314
    %1768 = vmatpush1.bf16.msra.mxu0 %v1313
    %1769 = vmatprep.subr.bf16.mxu0 %v1318
    %1770 = vmatpush1.bf16.msra.mxu0 %v1317
    %1771 = vmatprep.subr.bf16.mxu0 %v1322
    %1772 = vmatpush1.bf16.msra.mxu0 %v1321
    %1773 = vmatprep.subr.bf16.mxu0 %v1326
    %1774 = vmatpush1.bf16.msra.mxu0 %v1325
    %1775 = vmatprep.subr.bf16.mxu0 %v1330
    %1776 = vmatpush1.bf16.msra.mxu0 %v1329
    %1777 = vmatprep.subr.bf16.mxu0 %v1334
    %1778 = vmatpush1.bf16.msra.mxu0 %v1333
    %1779 = vmatprep.subr.bf16.mxu0 %v1338
    %1780 = vmatpush1.bf16.msra.mxu0 %v1337
    %1781 = vmatprep.subr.bf16.mxu0 %v1342
    %1782 = vmatpush1.bf16.msra.mxu0 %v1341
    %1783 = vmatprep.subr.bf16.mxu0 %v1346
    %1784 = vmatpush1.bf16.msra.mxu0 %v1345
    %1785 = vmatprep.subr.bf16.mxu0 %v1350
    %1786 = vmatpush1.bf16.msra.mxu0 %v1349
    %1787 = vmatprep.mubr.bf16.mxu0 %v112
    %1788 = vmatmul.mubr.bf16.gmra.mrb[0].mxu0 %v111
    %v1789 = vpop.f32.mrb[0].mxu0
    %v1790 = vadd.f32 %v1749, %v1789
    %v1791 = vpop.f32.mrb[0].mxu0
    %v1792 = vadd.f32 %v1751, %v1791
    %v1793 = vpop.f32.mrb[0].mxu0
    %v1794 = vpop.f32.mrb[0].mxu0
    %1795 = vdwg.mxu0
    %1796 = vmatprep.subr.bf16.mxu0 %v1354
    %1797 = vmatpush1.bf16.msra.mxu0 %v1353
    %1798 = vmatprep.subr.bf16.mxu0 %v1358
    %1799 = vmatpush1.bf16.msra.mxu0 %v1357
    %1800 = vmatprep.subr.bf16.mxu0 %v1362
    %1801 = vmatpush1.bf16.msra.mxu0 %v1361
    %1802 = vmatprep.subr.bf16.mxu0 %v1366
    %1803 = vmatpush1.bf16.msra.mxu0 %v1365
    %1804 = vmatprep.subr.bf16.mxu0 %v1370
    %1805 = vmatpush1.bf16.msra.mxu0 %v1369
    %1806 = vmatprep.subr.bf16.mxu0 %v1374
    %1807 = vmatpush1.bf16.msra.mxu0 %v1373
    %1808 = vmatprep.subr.bf16.mxu0 %v1378
    %1809 = vmatpush1.bf16.msra.mxu0 %v1377
    %1810 = vmatprep.subr.bf16.mxu0 %v1382
    %1811 = vmatpush1.bf16.msra.mxu0 %v1381
    %1812 = vmatprep.subr.bf16.mxu0 %v1386
    %1813 = vmatpush1.bf16.msra.mxu0 %v1385
    %1814 = vmatprep.subr.bf16.mxu0 %v1390
    %1815 = vmatpush1.bf16.msra.mxu0 %v1389
    %1816 = vmatprep.subr.bf16.mxu0 %v1394
    %1817 = vmatpush1.bf16.msra.mxu0 %v1393
    %1818 = vmatprep.subr.bf16.mxu0 %v1398
    %1819 = vmatpush1.bf16.msra.mxu0 %v1397
    %1820 = vmatprep.subr.bf16.mxu0 %v1402
    %1821 = vmatpush1.bf16.msra.mxu0 %v1401
    %1822 = vmatprep.subr.bf16.mxu0 %v1406
    %1823 = vmatpush1.bf16.msra.mxu0 %v1405
    %1824 = vmatprep.subr.bf16.mxu0 %v1410
    %1825 = vmatpush1.bf16.msra.mxu0 %v1409
    %1826 = vmatprep.subr.bf16.mxu0 %v1414
    %1827 = vmatpush1.bf16.msra.mxu0 %v1413
    %1828 = vmatprep.mubr.bf16.mxu0 %v114
    %1829 = vmatmul.mubr.bf16.gmra.mrb[0].mxu0 %v113
    %v1830 = vpop.f32.mrb[0].mxu0
    %v1831 = vadd.f32 %v1790, %v1830
    %v1832 = vpop.f32.mrb[0].mxu0
    %v1833 = vadd.f32 %v1792, %v1832
    %v1834 = vpop.f32.mrb[0].mxu0
    %v1835 = vpop.f32.mrb[0].mxu0
    %1836 = vdwg.mxu0
    %1837 = vmatprep.subr.bf16.mxu0 %v1164
    %1838 = vmatpush1.bf16.msra.mxu0 %v1163
    %1839 = vmatprep.subr.bf16.mxu0 %v1168
    %1840 = vmatpush1.bf16.msra.mxu0 %v1167
    %1841 = vmatprep.subr.bf16.mxu0 %v1172
    %1842 = vmatpush1.bf16.msra.mxu0 %v1171
    %1843 = vmatprep.subr.bf16.mxu0 %v1176
    %1844 = vmatpush1.bf16.msra.mxu0 %v1175
    %1845 = vmatprep.subr.bf16.mxu0 %v1180
    %1846 = vmatpush1.bf16.msra.mxu0 %v1179
    %1847 = vmatprep.subr.bf16.mxu0 %v1184
    %1848 = vmatpush1.bf16.msra.mxu0 %v1183
    %1849 = vmatprep.subr.bf16.mxu0 %v1188
    %1850 = vmatpush1.bf16.msra.mxu0 %v1187
    %1851 = vmatprep.subr.bf16.mxu0 %v1192
    %1852 = vmatpush1.bf16.msra.mxu0 %v1191
    %1853 = vmatprep.subr.bf16.mxu0 %v1196
    %1854 = vmatpush1.bf16.msra.mxu0 %v1195
    %1855 = vmatprep.subr.bf16.mxu0 %v1200
    %1856 = vmatpush1.bf16.msra.mxu0 %v1199
    %1857 = vmatprep.subr.bf16.mxu0 %v1204
    %1858 = vmatpush1.bf16.msra.mxu0 %v1203
    %1859 = vmatprep.subr.bf16.mxu0 %v1208
    %1860 = vmatpush1.bf16.msra.mxu0 %v1207
    %1861 = vmatprep.subr.bf16.mxu0 %v1212
    %1862 = vmatpush1.bf16.msra.mxu0 %v1211
    %1863 = vmatprep.subr.bf16.mxu0 %v1216
    %1864 = vmatpush1.bf16.msra.mxu0 %v1215
    %1865 = vmatprep.subr.bf16.mxu0 %v1220
    %1866 = vmatpush1.bf16.msra.mxu0 %v1219
    %1867 = vmatprep.subr.bf16.mxu0 %v1224
    %1868 = vmatpush1.bf16.msra.mxu0 %v1223
    %1869 = vmatprep.mubr.bf16.mxu0 %v108
    %1870 = vmatmul.mubr.bf16.gmra.mrb[0].mxu0 %v107
    %v1871 = vpop.f32.mrb[0].mxu0
    %v1872 = vadd.f32 %v384, %v1871
    %v1873 = vpop.f32.mrb[0].mxu0
    %v1874 = vadd.f32 %v388, %v1873
    %v1875 = vpop.f32.mrb[0].mxu0
    %v1876 = vpop.f32.mrb[0].mxu0
    %1877 = vdwg.mxu0
    %1878 = vmatprep.subr.bf16.mxu0 %v1228
    %1879 = vmatpush1.bf16.msra.mxu0 %v1227
    %1880 = vmatprep.subr.bf16.mxu0 %v1232
    %1881 = vmatpush1.bf16.msra.mxu0 %v1231
    %1882 = vmatprep.subr.bf16.mxu0 %v1236
    %1883 = vmatpush1.bf16.msra.mxu0 %v1235
    %1884 = vmatprep.subr.bf16.mxu0 %v1240
    %1885 = vmatpush1.bf16.msra.mxu0 %v1239
    %1886 = vmatprep.subr.bf16.mxu0 %v1244
    %1887 = vmatpush1.bf16.msra.mxu0 %v1243
    %1888 = vmatprep.subr.bf16.mxu0 %v1248
    %1889 = vmatpush1.bf16.msra.mxu0 %v1247
    %1890 = vmatprep.subr.bf16.mxu0 %v1252
    %1891 = vmatpush1.bf16.msra.mxu0 %v1251
    %1892 = vmatprep.subr.bf16.mxu0 %v1256
    %1893 = vmatpush1.bf16.msra.mxu0 %v1255
    %1894 = vmatprep.subr.bf16.mxu0 %v1260
    %1895 = vmatpush1.bf16.msra.mxu0 %v1259
    %1896 = vmatprep.subr.bf16.mxu0 %v1264
    %1897 = vmatpush1.bf16.msra.mxu0 %v1263
    %1898 = vmatprep.subr.bf16.mxu0 %v1268
    %1899 = vmatpush1.bf16.msra.mxu0 %v1267
    %1900 = vmatprep.subr.bf16.mxu0 %v1272
    %1901 = vmatpush1.bf16.msra.mxu0 %v1271
    %1902 = vmatprep.subr.bf16.mxu0 %v1276
    %1903 = vmatpush1.bf16.msra.mxu0 %v1275
    %1904 = vmatprep.subr.bf16.mxu0 %v1280
    %1905 = vmatpush1.bf16.msra.mxu0 %v1279
    %1906 = vmatprep.subr.bf16.mxu0 %v1284
    %1907 = vmatpush1.bf16.msra.mxu0 %v1283
    %1908 = vmatprep.subr.bf16.mxu0 %v1288
    %1909 = vmatpush1.bf16.msra.mxu0 %v1287
    %1910 = vmatprep.mubr.bf16.mxu0 %v110
    %1911 = vmatmul.mubr.bf16.gmra.mrb[0].mxu0 %v109
    %v1912 = vpop.f32.mrb[0].mxu0
    %v1913 = vadd.f32 %v1872, %v1912
    %v1914 = vpop.f32.mrb[0].mxu0
    %v1915 = vadd.f32 %v1874, %v1914
    %v1916 = vpop.f32.mrb[0].mxu0
    %v1917 = vpop.f32.mrb[0].mxu0
    %1918 = vdwg.mxu0
    %1919 = vmatprep.subr.bf16.mxu0 %v1292
    %1920 = vmatpush1.bf16.msra.mxu0 %v1291
    %1921 = vmatprep.subr.bf16.mxu0 %v1296
    %1922 = vmatpush1.bf16.msra.mxu0 %v1295
    %1923 = vmatprep.subr.bf16.mxu0 %v1300
    %1924 = vmatpush1.bf16.msra.mxu0 %v1299
    %1925 = vmatprep.subr.bf16.mxu0 %v1304
    %1926 = vmatpush1.bf16.msra.mxu0 %v1303
    %1927 = vmatprep.subr.bf16.mxu0 %v1308
    %1928 = vmatpush1.bf16.msra.mxu0 %v1307
    %1929 = vmatprep.subr.bf16.mxu0 %v1312
    %1930 = vmatpush1.bf16.msra.mxu0 %v1311
    %1931 = vmatprep.subr.bf16.mxu0 %v1316
    %1932 = vmatpush1.bf16.msra.mxu0 %v1315
    %1933 = vmatprep.subr.bf16.mxu0 %v1320
    %1934 = vmatpush1.bf16.msra.mxu0 %v1319
    %1935 = vmatprep.subr.bf16.mxu0 %v1324
    %1936 = vmatpush1.bf16.msra.mxu0 %v1323
    %1937 = vmatprep.subr.bf16.mxu0 %v1328
    %1938 = vmatpush1.bf16.msra.mxu0 %v1327
    %1939 = vmatprep.subr.bf16.mxu0 %v1332
    %1940 = vmatpush1.bf16.msra.mxu0 %v1331
    %1941 = vmatprep.subr.bf16.mxu0 %v1336
    %1942 = vmatpush1.bf16.msra.mxu0 %v1335
    %1943 = vmatprep.subr.bf16.mxu0 %v1340
    %1944 = vmatpush1.bf16.msra.mxu0 %v1339
    %1945 = vmatprep.subr.bf16.mxu0 %v1344
    %1946 = vmatpush1.bf16.msra.mxu0 %v1343
    %1947 = vmatprep.subr.bf16.mxu0 %v1348
    %1948 = vmatpush1.bf16.msra.mxu0 %v1347
    %1949 = vmatprep.subr.bf16.mxu0 %v1352
    %1950 = vmatpush1.bf16.msra.mxu0 %v1351
    %1951 = vmatprep.mubr.bf16.mxu0 %v112
    %1952 = vmatmul.mubr.bf16.gmra.mrb[0].mxu0 %v111
    %v1953 = vpop.f32.mrb[0].mxu0
    %v1954 = vadd.f32 %v1913, %v1953
    %v1955 = vpop.f32.mrb[0].mxu0
    %v1956 = vadd.f32 %v1915, %v1955
    %v1957 = vpop.f32.mrb[0].mxu0
    %v1958 = vpop.f32.mrb[0].mxu0
    %1959 = vdwg.mxu0
    %1960 = vmatprep.subr.bf16.mxu0 %v1356
    %1961 = vmatpush1.bf16.msra.mxu0 %v1355
    %1962 = vmatprep.subr.bf16.mxu0 %v1360
    %1963 = vmatpush1.bf16.msra.mxu0 %v1359
    %1964 = vmatprep.subr.bf16.mxu0 %v1364
    %1965 = vmatpush1.bf16.msra.mxu0 %v1363
    %1966 = vmatprep.subr.bf16.mxu0 %v1368
    %1967 = vmatpush1.bf16.msra.mxu0 %v1367
    %1968 = vmatprep.subr.bf16.mxu0 %v1372
    %1969 = vmatpush1.bf16.msra.mxu0 %v1371
    %1970 = vmatprep.subr.bf16.mxu0 %v1376
    %1971 = vmatpush1.bf16.msra.mxu0 %v1375
    %1972 = vmatprep.subr.bf16.mxu0 %v1380
    %1973 = vmatpush1.bf16.msra.mxu0 %v1379
    %1974 = vmatprep.subr.bf16.mxu0 %v1384
    %1975 = vmatpush1.bf16.msra.mxu0 %v1383
    %1976 = vmatprep.subr.bf16.mxu0 %v1388
    %1977 = vmatpush1.bf16.msra.mxu0 %v1387
    %1978 = vmatprep.subr.bf16.mxu0 %v1392
    %1979 = vmatpush1.bf16.msra.mxu0 %v1391
    %1980 = vmatprep.subr.bf16.mxu0 %v1396
    %1981 = vmatpush1.bf16.msra.mxu0 %v1395
    %1982 = vmatprep.subr.bf16.mxu0 %v1400
    %1983 = vmatpush1.bf16.msra.mxu0 %v1399
    %1984 = vmatprep.subr.bf16.mxu0 %v1404
    %1985 = vmatpush1.bf16.msra.mxu0 %v1403
    %1986 = vmatprep.subr.bf16.mxu0 %v1408
    %1987 = vmatpush1.bf16.msra.mxu0 %v1407
    %1988 = vmatprep.subr.bf16.mxu0 %v1412
    %1989 = vmatpush1.bf16.msra.mxu0 %v1411
    %1990 = vmatprep.subr.bf16.mxu0 %v1416
    %1991 = vmatpush1.bf16.msra.mxu0 %v1415
    %1992 = vmatprep.mubr.bf16.mxu0 %v114
    %1993 = vmatmul.mubr.bf16.gmra.mrb[0].mxu0 %v113
    %v1994 = vpop.f32.mrb[0].mxu0
    %v1995 = vadd.f32 %v1954, %v1994
    %v1996 = vpop.f32.mrb[0].mxu0
    %v1997 = vadd.f32 %v1956, %v1996
    %v1998 = vpop.f32.mrb[0].mxu0
    %v1999 = vpop.f32.mrb[0].mxu0
    %2000 = vdwg.mxu0
    %v2001 = vmax.f32 %v1831, 0.0
    %v2002 = vmax.f32 %v1833, 0.0
    %v2003 = vmax.f32 %v1995, 0.0
    %v2004 = vmax.f32 %v1997, 0.0
    %v2005 = vpack.c.bf16 %v2001, %v2001
    %v2006 = vpack.c.bf16 %v2002, %v2002
    %v2007 = vpack.c.bf16 %v2003, %v2003
    %v2008 = vpack.c.bf16 %v2004, %v2004
    %v2009 = vld [vmem:[#allocation7] sm:$0xf]
    %v2010 = vld [vmem:[#allocation7 + $0x4] sm:$0xf]
    %v2011 = vld [vmem:[#allocation7 + $0x8] sm:$0xf]
    %v2012 = vld [vmem:[#allocation7 + $0xc] sm:$0xf]
    %v2013 = vld [vmem:[#allocation7 + $0x10] sm:$0xf]
    %v2014 = vld [vmem:[#allocation7 + $0x14] sm:$0xf]
    %v2015 = vld [vmem:[#allocation7 + $0x18] sm:$0xf]
    %v2016 = vld [vmem:[#allocation7 + $0x1c] sm:$0xf]
    %v2017 = vld [vmem:[#allocation7 + $0x20] sm:$0xf]
    %v2018 = vld [vmem:[#allocation7 + $0x24] sm:$0xf]
    %v2019 = vld [vmem:[#allocation7 + $0x28] sm:$0xf]
    %v2020 = vld [vmem:[#allocation7 + $0x2c] sm:$0xf]
    %v2021 = vld [vmem:[#allocation7 + $0x30] sm:$0xf]
    %v2022 = vld [vmem:[#allocation7 + $0x34] sm:$0xf]
    %v2023 = vld [vmem:[#allocation7 + $0x38] sm:$0xf]
    %v2024 = vld [vmem:[#allocation7 + $0x3c] sm:$0xf]
    %v2025 = vld [vmem:[#allocation7 + $0x40] sm:$0xf]
    %v2026 = vld [vmem:[#allocation7 + $0x44] sm:$0xf]
    %v2027 = vld [vmem:[#allocation7 + $0x48] sm:$0xf]
    %v2028 = vld [vmem:[#allocation7 + $0x4c] sm:$0xf]
    %v2029 = vld [vmem:[#allocation7 + $0x50] sm:$0xf]
    %v2030 = vld [vmem:[#allocation7 + $0x54] sm:$0xf]
    %v2031 = vld [vmem:[#allocation7 + $0x58] sm:$0xf]
    %v2032 = vld [vmem:[#allocation7 + $0x5c] sm:$0xf]
    %v2033 = vld [vmem:[#allocation7 + $0x60] sm:$0xf]
    %v2034 = vld [vmem:[#allocation7 + $0x64] sm:$0xf]
    %v2035 = vld [vmem:[#allocation7 + $0x68] sm:$0xf]
    %v2036 = vld [vmem:[#allocation7 + $0x6c] sm:$0xf]
    %v2037 = vld [vmem:[#allocation7 + $0x70] sm:$0xf]
    %v2038 = vld [vmem:[#allocation7 + $0x74] sm:$0xf]
    %v2039 = vld [vmem:[#allocation7 + $0x78] sm:$0xf]
    %v2040 = vld [vmem:[#allocation7 + $0x7c] sm:$0xf]
    %v2041 = vld [vmem:[#allocation7 + $0x80] sm:$0xf]
    %v2042 = vld [vmem:[#allocation7 + $0x84] sm:$0xf]
    %v2043 = vld [vmem:[#allocation7 + $0x88] sm:$0xf]
    %v2044 = vld [vmem:[#allocation7 + $0x8c] sm:$0xf]
    %v2045 = vld [vmem:[#allocation7 + $0x90] sm:$0xf]
    %v2046 = vld [vmem:[#allocation7 + $0x94] sm:$0xf]
    %v2047 = vld [vmem:[#allocation7 + $0x98] sm:$0xf]
    %v2048 = vld [vmem:[#allocation7 + $0x9c] sm:$0xf]
    %v2049 = vld [vmem:[#allocation7 + $0xa0] sm:$0xf]
    %v2050 = vld [vmem:[#allocation7 + $0xa4] sm:$0xf]
    %v2051 = vld [vmem:[#allocation7 + $0xa8] sm:$0xf]
    %v2052 = vld [vmem:[#allocation7 + $0xac] sm:$0xf]
    %v2053 = vld [vmem:[#allocation7 + $0xb0] sm:$0xf]
    %v2054 = vld [vmem:[#allocation7 + $0xb4] sm:$0xf]
    %v2055 = vld [vmem:[#allocation7 + $0xb8] sm:$0xf]
    %v2056 = vld [vmem:[#allocation7 + $0xbc] sm:$0xf]
    %v2057 = vld [vmem:[#allocation7 + $0xc0] sm:$0xf]
    %v2058 = vld [vmem:[#allocation7 + $0xc4] sm:$0xf]
    %v2059 = vld [vmem:[#allocation7 + $0xc8] sm:$0xf]
    %v2060 = vld [vmem:[#allocation7 + $0xcc] sm:$0xf]
    %v2061 = vld [vmem:[#allocation7 + $0xd0] sm:$0xf]
    %v2062 = vld [vmem:[#allocation7 + $0xd4] sm:$0xf]
    %v2063 = vld [vmem:[#allocation7 + $0xd8] sm:$0xf]
    %v2064 = vld [vmem:[#allocation7 + $0xdc] sm:$0xf]
    %v2065 = vld [vmem:[#allocation7 + $0xe0] sm:$0xf]
    %v2066 = vld [vmem:[#allocation7 + $0xe4] sm:$0xf]
    %v2067 = vld [vmem:[#allocation7 + $0xe8] sm:$0xf]
    %v2068 = vld [vmem:[#allocation7 + $0xec] sm:$0xf]
    %v2069 = vld [vmem:[#allocation7 + $0xf0] sm:$0xf]
    %v2070 = vld [vmem:[#allocation7 + $0xf4] sm:$0xf]
    %v2071 = vld [vmem:[#allocation7 + $0xf8] sm:$0xf]
    %v2072 = vld [vmem:[#allocation7 + $0xfc] sm:$0xf]
    %v2073 = vld [vmem:[%s4] sm:$0x1]
    %v2075 = vlaneseq
    %v2076 = vshrl.u32 %v2075, 7
    %v2077 = vsub.s32 0, %v2076
    %v2078 = vrot.slane %v2073, %v2077
    %v2144 = vunpack.c.l.b16 %v2009
    %v2145 = vunpack.c.l.b16 %v2010
    %v2146 = vunpack.c.l.b16 %v2011
    %v2147 = vunpack.c.l.b16 %v2012
    %v2148 = vunpack.c.l.b16 %v2013
    %v2149 = vunpack.c.l.b16 %v2014
    %v2150 = vunpack.c.l.b16 %v2015
    %v2151 = vunpack.c.l.b16 %v2016
    %v2152 = vunpack.c.l.b16 %v2017
    %v2153 = vunpack.c.l.b16 %v2018
    %v2154 = vunpack.c.l.b16 %v2019
    %v2155 = vunpack.c.l.b16 %v2020
    %v2156 = vunpack.c.l.b16 %v2021
    %v2157 = vunpack.c.l.b16 %v2022
    %v2158 = vunpack.c.l.b16 %v2023
    %v2159 = vunpack.c.l.b16 %v2024
    %v2160 = vunpack.c.l.b16 %v2025
    %v2161 = vunpack.c.l.b16 %v2026
    %v2162 = vunpack.c.l.b16 %v2027
    %v2163 = vunpack.c.l.b16 %v2028
    %v2164 = vunpack.c.l.b16 %v2029
    %v2165 = vunpack.c.l.b16 %v2030
    %v2166 = vunpack.c.l.b16 %v2031
    %v2167 = vunpack.c.l.b16 %v2032
    %v2168 = vunpack.c.l.b16 %v2033
    %v2169 = vunpack.c.l.b16 %v2034
    %v2170 = vunpack.c.l.b16 %v2035
    %v2171 = vunpack.c.l.b16 %v2036
    %v2172 = vunpack.c.l.b16 %v2037
    %v2173 = vunpack.c.l.b16 %v2038
    %v2174 = vunpack.c.l.b16 %v2039
    %v2175 = vunpack.c.l.b16 %v2040
    %v2176 = vunpack.c.l.b16 %v2041
    %v2177 = vunpack.c.l.b16 %v2042
    %v2178 = vunpack.c.l.b16 %v2043
    %v2179 = vunpack.c.l.b16 %v2044
    %v2180 = vunpack.c.l.b16 %v2045
    %v2181 = vunpack.c.l.b16 %v2046
    %v2182 = vunpack.c.l.b16 %v2047
    %v2183 = vunpack.c.l.b16 %v2048
    %v2184 = vunpack.c.l.b16 %v2049
    %v2185 = vunpack.c.l.b16 %v2050
    %v2186 = vunpack.c.l.b16 %v2051
    %v2187 = vunpack.c.l.b16 %v2052
    %v2188 = vunpack.c.l.b16 %v2053
    %v2189 = vunpack.c.l.b16 %v2054
    %v2190 = vunpack.c.l.b16 %v2055
    %v2191 = vunpack.c.l.b16 %v2056
    %v2192 = vunpack.c.l.b16 %v2057
    %v2193 = vunpack.c.l.b16 %v2058
    %v2194 = vunpack.c.l.b16 %v2059
    %v2195 = vunpack.c.l.b16 %v2060
    %v2196 = vunpack.c.l.b16 %v2061
    %v2197 = vunpack.c.l.b16 %v2062
    %v2198 = vunpack.c.l.b16 %v2063
    %v2199 = vunpack.c.l.b16 %v2064
    %v2200 = vunpack.c.l.b16 %v2065
    %v2201 = vunpack.c.l.b16 %v2066
    %v2202 = vunpack.c.l.b16 %v2067
    %v2203 = vunpack.c.l.b16 %v2068
    %v2204 = vunpack.c.l.b16 %v2069
    %v2205 = vunpack.c.l.b16 %v2070
    %v2206 = vunpack.c.l.b16 %v2071
    %v2207 = vunpack.c.l.b16 %v2072
    %v2208 = vpack.c.b16 %v2145, %v2144
    %v2209 = vpack.c.b16 %v2147, %v2146
    %v2210 = vpack.c.b16 %v2149, %v2148
    %v2211 = vpack.c.b16 %v2151, %v2150
    %v2212 = vpack.c.b16 %v2153, %v2152
    %v2213 = vpack.c.b16 %v2155, %v2154
    %v2214 = vpack.c.b16 %v2157, %v2156
    %v2215 = vpack.c.b16 %v2159, %v2158
    %v2216 = vpack.c.b16 %v2161, %v2160
    %v2217 = vpack.c.b16 %v2163, %v2162
    %v2218 = vpack.c.b16 %v2165, %v2164
    %v2219 = vpack.c.b16 %v2167, %v2166
    %v2220 = vpack.c.b16 %v2169, %v2168
    %v2221 = vpack.c.b16 %v2171, %v2170
    %v2222 = vpack.c.b16 %v2173, %v2172
    %v2223 = vpack.c.b16 %v2175, %v2174
    %v2224 = vpack.c.b16 %v2177, %v2176
    %v2225 = vpack.c.b16 %v2179, %v2178
    %v2226 = vpack.c.b16 %v2181, %v2180
    %v2227 = vpack.c.b16 %v2183, %v2182
    %v2228 = vpack.c.b16 %v2185, %v2184
    %v2229 = vpack.c.b16 %v2187, %v2186
    %v2230 = vpack.c.b16 %v2189, %v2188
    %v2231 = vpack.c.b16 %v2191, %v2190
    %v2232 = vpack.c.b16 %v2193, %v2192
    %v2233 = vpack.c.b16 %v2195, %v2194
    %v2234 = vpack.c.b16 %v2197, %v2196
    %v2235 = vpack.c.b16 %v2199, %v2198
    %v2236 = vpack.c.b16 %v2201, %v2200
    %v2237 = vpack.c.b16 %v2203, %v2202
    %v2238 = vpack.c.b16 %v2205, %v2204
    %v2239 = vpack.c.b16 %v2207, %v2206
    %2272 = vmatprep.subr.bf16.mxu0 0
    %2273 = vmatpush1.bf16.msra.mxu0 %v2208
    %2274 = vmatprep.subr.bf16.mxu0 0
    %2275 = vmatpush1.bf16.msra.mxu0 %v2209
    %2276 = vmatprep.subr.bf16.mxu0 0
    %2277 = vmatpush1.bf16.msra.mxu0 %v2210
    %2278 = vmatprep.subr.bf16.mxu0 0
    %2279 = vmatpush1.bf16.msra.mxu0 %v2211
    %2280 = vmatprep.subr.bf16.mxu0 0
    %2281 = vmatpush1.bf16.msra.mxu0 %v2212
    %2282 = vmatprep.subr.bf16.mxu0 0
    %2283 = vmatpush1.bf16.msra.mxu0 %v2213
    %2284 = vmatprep.subr.bf16.mxu0 0
    %2285 = vmatpush1.bf16.msra.mxu0 %v2214
    %2286 = vmatprep.subr.bf16.mxu0 0
    %2287 = vmatpush1.bf16.msra.mxu0 %v2215
    %2288 = vmatprep.subr.bf16.mxu0 0
    %2289 = vmatpush1.bf16.msra.mxu0 %v2216
    %2290 = vmatprep.subr.bf16.mxu0 0
    %2291 = vmatpush1.bf16.msra.mxu0 %v2217
    %2292 = vmatprep.subr.bf16.mxu0 0
    %2293 = vmatpush1.bf16.msra.mxu0 %v2218
    %2294 = vmatprep.subr.bf16.mxu0 0
    %2295 = vmatpush1.bf16.msra.mxu0 %v2219
    %2296 = vmatprep.subr.bf16.mxu0 0
    %2297 = vmatpush1.bf16.msra.mxu0 %v2220
    %2298 = vmatprep.subr.bf16.mxu0 0
    %2299 = vmatpush1.bf16.msra.mxu0 %v2221
    %2300 = vmatprep.subr.bf16.mxu0 0
    %2301 = vmatpush1.bf16.msra.mxu0 %v2222
    %2302 = vmatprep.subr.bf16.mxu0 0
    %2303 = vmatpush1.bf16.msra.mxu0 %v2223
    %2304 = vmatprep.mubr.bf16.mxu0 %v2006
    %2305 = vmatmul.mubr.bf16.gmra.mrb[0].mxu0 %v2005
    %v2306 = vpop.f32.mrb[0].mxu0
    %v2307 = vadd.f32 %v2078, %v2306
    %v2308 = vpop.f32.mrb[0].mxu0
    %v2309 = vpop.f32.mrb[0].mxu0
    %v2310 = vpop.f32.mrb[0].mxu0
    %2311 = vdwg.mxu0
    %2312 = vmatprep.subr.bf16.mxu0 0
    %2313 = vmatpush1.bf16.msra.mxu0 %v2224
    %2314 = vmatprep.subr.bf16.mxu0 0
    %2315 = vmatpush1.bf16.msra.mxu0 %v2225
    %2316 = vmatprep.subr.bf16.mxu0 0
    %2317 = vmatpush1.bf16.msra.mxu0 %v2226
    %2318 = vmatprep.subr.bf16.mxu0 0
    %2319 = vmatpush1.bf16.msra.mxu0 %v2227
    %2320 = vmatprep.subr.bf16.mxu0 0
    %2321 = vmatpush1.bf16.msra.mxu0 %v2228
    %2322 = vmatprep.subr.bf16.mxu0 0
    %2323 = vmatpush1.bf16.msra.mxu0 %v2229
    %2324 = vmatprep.subr.bf16.mxu0 0
    %2325 = vmatpush1.bf16.msra.mxu0 %v2230
    %2326 = vmatprep.subr.bf16.mxu0 0
    %2327 = vmatpush1.bf16.msra.mxu0 %v2231
    %2328 = vmatprep.subr.bf16.mxu0 0
    %2329 = vmatpush1.bf16.msra.mxu0 %v2232
    %2330 = vmatprep.subr.bf16.mxu0 0
    %2331 = vmatpush1.bf16.msra.mxu0 %v2233
    %2332 = vmatprep.subr.bf16.mxu0 0
    %2333 = vmatpush1.bf16.msra.mxu0 %v2234
    %2334 = vmatprep.subr.bf16.mxu0 0
    %2335 = vmatpush1.bf16.msra.mxu0 %v2235
    %2336 = vmatprep.subr.bf16.mxu0 0
    %2337 = vmatpush1.bf16.msra.mxu0 %v2236
    %2338 = vmatprep.subr.bf16.mxu0 0
    %2339 = vmatpush1.bf16.msra.mxu0 %v2237
    %2340 = vmatprep.subr.bf16.mxu0 0
    %2341 = vmatpush1.bf16.msra.mxu0 %v2238
    %2342 = vmatprep.subr.bf16.mxu0 0
    %2343 = vmatpush1.bf16.msra.mxu0 %v2239
    %2344 = vmatprep.mubr.bf16.mxu0 %v2008
    %2345 = vmatmul.mubr.bf16.gmra.mrb[0].mxu0 %v2007
    %v2346 = vpop.f32.mrb[0].mxu0
    %v2347 = vadd.f32 %v2307, %v2346
    %v2348 = vpop.f32.mrb[0].mxu0
    %v2349 = vpop.f32.mrb[0].mxu0
    %v2350 = vpop.f32.mrb[0].mxu0
    %2351 = vdwg.mxu0
    %2352 = vst [vmem:[#allocation8] sm:$0x3] %v2347
    // Predicated region
    $region34: #{tpu_custom_call.1} parent=1 // pred_check
      _
    $region35: #{tpu_custom_call.1} parent=1 // pred_check_branch
      %2354 = sbr.rel (0) target = $region37
    $region36: #{tpu_custom_call.1} parent=1 // pred_region
      %s2356 = ssub.s32 32, 32
      %2357 = vsyncadd [#allocation4], %s2356
      %s2359 = sshll.u32 [#allocation8], 4
      %s2360 = int_to_ptr.vmem [resolvable:$true] %s2359
      %2362 = dma.vmem_to_hbm [thread:$0]  %s2360, 32, %s5, [#allocation4]
    $region37: #{tpu_custom_call.1} parent=1 // pred_fallthru
      _
    // Predicated region
    $region38: #{tpu_custom_call.1} parent=1 // pred_check
      _
    $region39: #{tpu_custom_call.1} parent=1 // pred_check_branch
      %2364 = sbr.rel (0) target = $region41
    $region40: #{tpu_custom_call.1} parent=1 // pred_region
      %2365 = dma.done [#allocation4], 32
    $region41: #{tpu_custom_call.1} parent=1 // pred_fallthru
      _
    %2366 = vsyncpa [#allocation3], 1
    %2367 = vsyncpa [#allocation6], 1
    %2368 = vsyncpa [#allocation4], 1

</llo_original>
